<compile_context>
chip_gen: v6e
topology: v6e:2x2x1
jax: 0.10.0
libtpu: 0.0.40
codegen_flags: <defaults>
</compile_context>

<pallas_src>
import functools
import math

import jax
import jax.numpy as jnp
from jax.experimental import pallas as pl
from jax.experimental.pallas import tpu as pltpu


_VMEM_LIMIT = 48 * 1024 * 1024   # fits v7x's 64 MiB physical VMEM with headroom


def _round_up(x: int, m: int) -> int:
    return (x + m - 1) // m * m


def _ff_tile(d_ff: int, target: int = 512) -> int:
    """Reduction tile over d_ff: multiple of 128 dividing d_ff, else d_ff."""
    if d_ff % 128 == 0:
        t = max(128, min(target, d_ff) // 128 * 128)
        while d_ff % t:
            t -= 128
        return t
    return d_ff


# ---------------------------------------------------------------------------
# 1. Fused QKV projection: (M, d) f32 -> (3, M, d) bf16   (Wq pre-scaled)
# ---------------------------------------------------------------------------
def _qkv_kernel(x_ref, w_ref, b_ref, o_ref):
    xb = x_ref[...].astype(jnp.bfloat16)
    o_ref[0] = (jnp.dot(xb, w_ref[0], preferred_element_type=jnp.float32)
                + b_ref[0]).astype(o_ref.dtype)


def qkv_projection(x2d, w3, b3, *, tm):
    M, d = x2d.shape
    return pl.pallas_call(
        _qkv_kernel,
        out_shape=jax.ShapeDtypeStruct((3, M, d), jnp.bfloat16),
        grid_spec=pltpu.PrefetchScalarGridSpec(
            num_scalar_prefetch=0,
            grid=(M // tm, 3),
            in_specs=[
                pl.BlockSpec((tm, d), lambda i, j: (i, 0)),      # x tile (reused over j)
                pl.BlockSpec((1, d, d), lambda i, j: (j, 0, 0)),  # one of Wq/Wk/Wv
                pl.BlockSpec((1, 1, d), lambda i, j: (j, 0, 0)),
            ],
            out_specs=pl.BlockSpec((1, tm, d), lambda i, j: (j, i, 0)),
        ),
        compiler_params=pltpu.CompilerParams(
            dimension_semantics=("parallel", "parallel"),
            vmem_limit_bytes=_VMEM_LIMIT),
    )(x2d, w3, b3)


# ---------------------------------------------------------------------------
# 2. Flash attention: grid (B, q_tiles, kv_tiles), heads sliced in-kernel.
#    Inputs stay in (B, S, d_model) layout (no HBM head transposes); the
#    output is head-concatenated (lane-dense) per q tile.
# ---------------------------------------------------------------------------
def _flash_attn_kernel(q_ref, k_ref, v_ref, kv_ref, o_ref,
                       m_ref, l_ref, acc_ref, *, h, d_k):
    ki = pl.program_id(2)

    @pl.when(ki == 0)
    def _():
        m_ref[...] = jnp.full_like(m_ref, -jnp.inf)
        l_ref[...] = jnp.zeros_like(l_ref)
        acc_ref[...] = jnp.zeros_like(acc_ref)

    q = q_ref[0, 0]             # (tq, d_model) bf16, scale folded into Wq
    k = k_ref[0, 0]             # (tk, d_model) bf16
    v = v_ref[0, 0]             # (tk, d_model) bf16
    valid = kv_ref[0] > 0.0     # (1, tk) key-padding mask

    for hh in range(h):                                  # static, small h
        cols = slice(hh * d_k, (hh + 1) * d_k)
        s = jax.lax.dot_general(q[:, cols], k[:, cols],
                                (((1,), (1,)), ((), ())),
                                preferred_element_type=jnp.float32)
        s = jnp.where(valid, s, -1e9)                    # (tq, tk)

        m_prev = m_ref[:, hh:hh + 1]                     # (tq, 1)
        l_prev = l_ref[:, hh:hh + 1]
        m_new = jnp.maximum(m_prev, jnp.max(s, axis=-1, keepdims=True))
        alpha = jnp.exp(m_prev - m_new)
        p = jnp.exp(s - m_new)                           # (tq, tk)
        l_ref[:, hh:hh + 1] = alpha * l_prev + jnp.sum(p, axis=-1, keepdims=True)

        pv = jax.lax.dot_general(p.astype(v.dtype), v[:, cols],
                                 (((1,), (0,)), ((), ())),
                                 preferred_element_type=jnp.float32)
        acc_ref[:, cols] = alpha * acc_ref[:, cols] + pv
        m_ref[:, hh:hh + 1] = m_new

    @pl.when(ki == pl.num_programs(2) - 1)
    def _():
        for hh in range(h):
            cols = slice(hh * d_k, (hh + 1) * d_k)
            inv = pl.reciprocal(l_ref[:, hh:hh + 1], approx=True)
            acc_ref[:, cols] = acc_ref[:, cols] * inv
        o_ref[0] = acc_ref[...].astype(o_ref.dtype)      # single lane-dense store


def flash_attention(qkv, key_valid, *, h, tq, tk):
    """qkv: (3, B, Sp, d) bf16; key_valid: (B, 1, Sp) f32 -> (B, Sp, d) bf16."""
    _, B, Sp, d = qkv.shape
    d_k = d // h
    kernel = functools.partial(_flash_attn_kernel, h=h, d_k=d_k)
    return pl.pallas_call(
        kernel,
        out_shape=jax.ShapeDtypeStruct((B, Sp, d), jnp.bfloat16),
        grid_spec=pltpu.PrefetchScalarGridSpec(
            num_scalar_prefetch=0,
            grid=(B, Sp // tq, Sp // tk),
            in_specs=[
                pl.BlockSpec((1, 1, tq, d), lambda b, qi, ki: (0, b, qi, 0)),  # Q
                pl.BlockSpec((1, 1, tk, d), lambda b, qi, ki: (1, b, ki, 0)),  # K
                pl.BlockSpec((1, 1, tk, d), lambda b, qi, ki: (2, b, ki, 0)),  # V
                pl.BlockSpec((1, 1, tk), lambda b, qi, ki: (b, 0, ki)),        # key valid
            ],
            out_specs=pl.BlockSpec((1, tq, d), lambda b, qi, ki: (b, qi, 0)),
            scratch_shapes=[
                pltpu.VMEM((tq, h), jnp.float32),   # running max per head
                pltpu.VMEM((tq, h), jnp.float32),   # running sum per head
                pltpu.VMEM((tq, d), jnp.float32),   # output accumulator
            ],
        ),
        compiler_params=pltpu.CompilerParams(
            dimension_semantics=("parallel", "parallel", "arbitrary"),
            vmem_limit_bytes=_VMEM_LIMIT),
    )(qkv, qkv, qkv, key_valid)


# ---------------------------------------------------------------------------
# 3. Residual + LayerNorm (sublayer 1; fresh nn.LayerNorm => gamma=1, beta=0)
# ---------------------------------------------------------------------------
def _add_ln_kernel(x_ref, y_ref, o_ref, *, eps):
    s = x_ref[...].astype(jnp.float32) + y_ref[...].astype(jnp.float32)
    mu = jnp.mean(s, axis=-1, keepdims=True)
    c = s - mu
    var = jnp.mean(c * c, axis=-1, keepdims=True)
    o_ref[...] = (c * jax.lax.rsqrt(var + eps)).astype(o_ref.dtype)


def add_layernorm(x2d, y2d, *, tm, eps=1e-5):
    M, d = x2d.shape
    return pl.pallas_call(
        functools.partial(_add_ln_kernel, eps=eps),
        out_shape=jax.ShapeDtypeStruct((M, d), jnp.float32),
        grid_spec=pltpu.PrefetchScalarGridSpec(
            num_scalar_prefetch=0,
            grid=(M // tm,),
            in_specs=[pl.BlockSpec((tm, d), lambda i: (i, 0)),
                      pl.BlockSpec((tm, d), lambda i: (i, 0))],
            out_specs=pl.BlockSpec((tm, d), lambda i: (i, 0)),
        ),
        compiler_params=pltpu.CompilerParams(
            dimension_semantics=("parallel",),
            vmem_limit_bytes=_VMEM_LIMIT),
    )(x2d, y2d)


# ---------------------------------------------------------------------------
# 4. FFN + residual + LayerNorm fused (sublayer 2), d_ff-tiled reduction,
#    bf16 MXU operands, f32 accumulator.
# ---------------------------------------------------------------------------
def _ffn_res_ln_kernel(x_ref, w1_ref, b1_ref, w2_ref, b2_ref, o_ref, acc_ref, *, eps):
    kk = pl.program_id(1)

    @pl.when(kk == 0)
    def _():
        acc_ref[...] = jnp.zeros_like(acc_ref)

    xb = x_ref[...].astype(jnp.bfloat16)
    hidden = jnp.dot(xb, w1_ref[...], preferred_element_type=jnp.float32)
    hidden = jnp.maximum(hidden + b1_ref[...], 0.0)
    acc_ref[...] += jnp.dot(hidden.astype(jnp.bfloat16), w2_ref[...],
                            preferred_element_type=jnp.float32)

    @pl.when(kk == pl.num_programs(1) - 1)
    def _():
        # b2 once, residual add, then LayerNorm — all on the resident acc.
        s = acc_ref[...] + b2_ref[...] + x_ref[...].astype(jnp.float32)
        mu = jnp.mean(s, axis=-1, keepdims=True)
        c = s - mu
        var = jnp.mean(c * c, axis=-1, keepdims=True)
        o_ref[...] = (c * jax.lax.rsqrt(var + eps)).astype(o_ref.dtype)


def ffn_residual_layernorm(x2d, w1, b1, w2, b2, *, tm, tk_ff, eps=1e-5):
    M, d = x2d.shape
    d_ff = w1.shape[1]
    n_m, n_k = M // tm, d_ff // tk_ff
    cost = pl.CostEstimate(
        flops=4 * M * d * d_ff,
        transcendentals=0,
        bytes_accessed=(M * d * 4                       # x (read once per m tile)
                        + n_m * 2 * d * d_ff * 2        # W1+W2 streamed per m tile
                        + n_m * (d_ff + d) * 4          # biases
                        + M * d * 4))                   # output
    return pl.pallas_call(
        functools.partial(_ffn_res_ln_kernel, eps=eps),
        out_shape=jax.ShapeDtypeStruct((M, d), jnp.float32),
        grid_spec=pltpu.PrefetchScalarGridSpec(
            num_scalar_prefetch=0,
            grid=(n_m, n_k),
            in_specs=[
                pl.BlockSpec((tm, d), lambda i, k: (i, 0)),       # x / residual
                pl.BlockSpec((d, tk_ff), lambda i, k: (0, k)),    # W1 chunk
                pl.BlockSpec((1, tk_ff), lambda i, k: (0, k)),    # b1 chunk
                pl.BlockSpec((tk_ff, d), lambda i, k: (k, 0)),    # W2 chunk
                pl.BlockSpec((1, d), lambda i, k: (0, 0)),        # b2
            ],
            out_specs=pl.BlockSpec((tm, d), lambda i, k: (i, 0)),
            scratch_shapes=[pltpu.VMEM((tm, d), jnp.float32)],
        ),
        compiler_params=pltpu.CompilerParams(
            dimension_semantics=("parallel", "arbitrary"),
            vmem_limit_bytes=_VMEM_LIMIT),
        cost_estimate=cost,
    )(x2d, w1, b1, w2, b2)


# ---------------------------------------------------------------------------
# EncoderLayer forward
# ---------------------------------------------------------------------------
@functools.partial(jax.jit, static_argnames=("h",))
def encoder_layer(x, key_valid, params, *, h):
    """x: (B, S, d_model) f32; key_valid: (B, S) with 1.0=attend, 0.0=masked."""
    B, S, d_model = x.shape
    assert d_model % h == 0
    d_k = d_model // h

    # Pad the sequence once; everything below runs at the padded length.
    if S >= 128:
        Sp = _round_up(S, 128)
        tq = tk = 128
    else:
        Sp = _round_up(S, 8)
        tq = tk = Sp
    if Sp != S:
        x = jnp.pad(x, ((0, 0), (0, Sp - S), (0, 0)))
        key_valid = jnp.pad(key_valid, ((0, 0), (0, Sp - S)))
    M = B * Sp
    tm = math.gcd(M, 512)          # matmul-kernel token tile (divides M)
    tm_ln = math.gcd(M, 1024)      # LN token tile
    tk_ff = _ff_tile(params["w1"].shape[1])

    # Parameter prep: bf16 MXU operands, 1/sqrt(d_k) folded into Wq/bq.
    scale = 1.0 / math.sqrt(d_k)
    w3 = jnp.stack([params["wq"] * scale, params["wk"], params["wv"]]
                   ).astype(jnp.bfloat16)                                # (3, d, d)
    b3 = jnp.stack([params["bq"] * scale, params["bk"], params["bv"]]
                   ).astype(jnp.float32).reshape(3, 1, d_model)
    w1 = params["w1"].astype(jnp.bfloat16)
    w2 = params["w2"].astype(jnp.bfloat16)
    b1 = params["b1"].astype(jnp.float32).reshape(1, -1)
    b2 = params["b2"].astype(jnp.float32).reshape(1, -1)

    x2d = x.reshape(M, d_model)

    # Fused QKV projection -> (3, M, d_model) bf16 (no HBM head transposes).
    qkv = qkv_projection(x2d, w3, b3, tm=tm).reshape(3, B, Sp, d_model)

    # Flash attention with in-kernel head slicing and compact key-padding mask.
    # NOTE: the reference module's forward never applies self.wo, so neither do we.
    attn = flash_attention(qkv, key_valid.reshape(B, 1, Sp).astype(jnp.float32),
                           h=h, tq=tq, tk=tk)

    # Sublayer 1: LN(x + dropout(attn)); dropout = identity (inference).
    a2d = add_layernorm(x2d, attn.reshape(M, d_model), tm=tm_ln)

    # Sublayer 2 fused into the FFN epilogue: LN(a + FFN(a)).
    o2d = ffn_residual_layernorm(a2d, w1, b1, w2, b2, tm=tm, tk_ff=tk_ff)

    out = o2d.reshape(B, Sp, d_model)
    return out[:, :S, :] if Sp != S else out


# ---------------------------------------------------------------------------
# Parameter init (mimics nn.Linear uniform(-1/sqrt(fan_in), +)); weights stored
# transposed relative to nn.Linear, i.e. (in, out). `wo` exists in the PyTorch
# module but is never used by its forward, so it is omitted.
# ---------------------------------------------------------------------------
def init_params(key, d_model, d_ff, dtype=jnp.float32):
    ks = jax.random.split(key, 10)

    def lin(kw, kb, fan_in, fan_out):
        bound = 1.0 / math.sqrt(fan_in)
        w = jax.random.uniform(kw, (fan_in, fan_out), dtype, -bound, bound)
        b = jax.random.uniform(kb, (fan_out,), dtype, -bound, bound)
        return w, b

    wq, bq = lin(ks[0], ks[1], d_model, d_model)
    wk, bk = lin(ks[2], ks[3], d_model, d_model)
    wv, bv = lin(ks[4], ks[5], d_model, d_model)
    w1, b1 = lin(ks[6], ks[7], d_model, d_ff)
    w2, b2 = lin(ks[8], ks[9], d_ff, d_model)
    return dict(wq=wq, bq=bq, wk=wk, bk=bk, wv=wv, bv=bv,
                w1=w1, b1=b1, w2=w2, b2=b2)


# ---------------------------------------------------------------------------
# Pure-JAX reference mirroring the kernel's bf16-operand / f32-accumulate math
# ---------------------------------------------------------------------------
def encoder_layer_reference(x, key_valid, params, *, h):
    B, S, d_model = x.shape
    d_k = d_model // h
    scale = 1.0 / math.sqrt(d_k)

    def ln(t):
        mu = jnp.mean(t, axis=-1, keepdims=True)
        var = jnp.mean((t - mu) ** 2, axis=-1, keepdims=True)
        return (t - mu) * jax.lax.rsqrt(var + 1e-5)

    xb = x.astype(jnp.bfloat16)

    def proj(w, b, s=1.0):
        wb = (w * s).astype(jnp.bfloat16)
        return (jnp.einsum("bsd,de->bse", xb, wb,
                           preferred_element_type=jnp.float32) + b * s)

    q = proj(params["wq"], params["bq"], scale).astype(jnp.bfloat16)
    k = proj(params["wk"], params["bk"]).astype(jnp.bfloat16)
    v = proj(params["wv"], params["bv"]).astype(jnp.bfloat16)

    def heads(t):
        return t.reshape(B, S, h, d_k).transpose(0, 2, 1, 3)

    q, k, v = heads(q), heads(k), heads(v)
    s = jnp.einsum("bhqd,bhkd->bhqk", q, k, preferred_element_type=jnp.float32)
    s = jnp.where(key_valid[:, None, None, :] > 0, s, -1e9)
    p = jax.nn.softmax(s, axis=-1)
    attn = jnp.einsum("bhqk,bhkd->bhqd", p.astype(jnp.bfloat16), v,
                      preferred_element_type=jnp.float32)
    attn = attn.transpose(0, 2, 1, 3).reshape(B, S, d_model).astype(jnp.bfloat16)

    a = ln(x + attn.astype(jnp.float32))

    ab = a.astype(jnp.bfloat16)
    h1 = jnp.maximum(
        jnp.einsum("bsd,df->bsf", ab, params["w1"].astype(jnp.bfloat16),
                   preferred_element_type=jnp.float32) + params["b1"], 0.0)
    f = jnp.einsum("bsf,fd->bsd", h1.astype(jnp.bfloat16),
                   params["w2"].astype(jnp.bfloat16),
                   preferred_element_type=jnp.float32) + params["b2"]
    return ln(a + f)


if __name__ == "__main__":
    key = jax.random.PRNGKey(0)
    B, S, d_model, h, d_ff = 2, 8, 32, 4, 64

    k_x, k_p = jax.random.split(key)
    x = jax.random.normal(k_x, (B, S, d_model), jnp.float32)
    params = init_params(k_p, d_model, d_ff)

    # Key-padding mask: batch 1 masks out its last two key positions.
    key_valid = jnp.array([[1.0] * S, [1.0] * (S - 2) + [0.0] * 2], jnp.float32)

    out = jax.block_until_ready(encoder_layer(x, key_valid, params, h=h))
    ref = encoder_layer_reference(x, key_valid, params, h=h)

    assert out.shape == (B, S, d_model)
    err = float(jnp.max(jnp.abs(out - ref)))
    assert err < 2e-2, f"max abs err {err}"
    print("KERNEL_OK")
</pallas_src>

<mosaic_0001>
module attributes {stable_mosaic.version = 11 : i64} {
  func.func @_qkv_kernel(%arg0: i32, %arg1: i32, %arg2: memref<16x32xf32, #tpu.memory_space<vmem>>, %arg3: memref<1x32x32xbf16, #tpu.memory_space<vmem>>, %arg4: memref<1x1x32xf32, #tpu.memory_space<vmem>>, %arg5: memref<1x16x32xbf16, #tpu.memory_space<vmem>>) attributes {dimension_semantics = [#tpu.dimension_semantics<parallel>, #tpu.dimension_semantics<parallel>], iteration_bounds = array<i64: 1, 3>, scalar_prefetch = 0 : i64, scratch_operands = 0 : i64, tpu.core_type = #tpu.core_type<tc>, window_params = [{transform_indices = @transform_0, window_bounds = array<i64: 16, 32>}, {transform_indices = @transform_1, window_bounds = array<i64: 1, 32, 32>}, {transform_indices = @transform_2, window_bounds = array<i64: 1, 1, 32>}, {transform_indices = @transform_3, window_bounds = array<i64: 1, 16, 32>}]} {
    %c0 = arith.constant 0 : index
    %c0_0 = arith.constant 0 : index
    %0 = vector.load %arg2[%c0, %c0_0] : memref<16x32xf32, #tpu.memory_space<vmem>>, vector<16x32xf32>
    %1 = arith.truncf %0 : vector<16x32xf32> to vector<16x32xbf16>
    %c0_1 = arith.constant 0 : index
    %c0_2 = arith.constant 0 : index
    %c0_3 = arith.constant 0 : index
    %2 = vector.load %arg3[%c0_1, %c0_2, %c0_3] : memref<1x32x32xbf16, #tpu.memory_space<vmem>>, vector<1x32x32xbf16>
    %3 = vector.shape_cast %2 : vector<1x32x32xbf16> to vector<32x32xbf16>
    %cst = arith.constant dense<0.000000e+00> : vector<16x32xf32>
    %4 = tpu.matmul %1, %3, %cst {dimension_numbers = #tpu.dot_dimension_numbers<[1], [0], [0], [1], [0, 0, 1, 1], [], []>} : vector<16x32xbf16>, vector<32x32xbf16>, vector<16x32xf32> -> vector<16x32xf32>
    %c0_4 = arith.constant 0 : index
    %c0_5 = arith.constant 0 : index
    %c0_6 = arith.constant 0 : index
    %5 = vector.load %arg4[%c0_4, %c0_5, %c0_6] : memref<1x1x32xf32, #tpu.memory_space<vmem>>, vector<1x1x32xf32>
    %6 = vector.shape_cast %5 : vector<1x1x32xf32> to vector<1x32xf32>
    %7 = vector.broadcast %6 : vector<1x32xf32> to vector<16x32xf32>
    %8 = arith.addf %4, %7 : vector<16x32xf32>
    %9 = arith.truncf %8 : vector<16x32xf32> to vector<16x32xbf16>
    %c0_7 = arith.constant 0 : index
    %c0_8 = arith.constant 0 : index
    %c0_9 = arith.constant 0 : index
    %10 = vector.load %arg5[%c0_7, %c0_8, %c0_9] : memref<1x16x32xbf16, #tpu.memory_space<vmem>>, vector<1x16x32xbf16>
    %11 = vector.shape_cast %10 : vector<1x16x32xbf16> to vector<16x32xbf16>
    %12 = vector.shape_cast %9 : vector<16x32xbf16> to vector<1x16x32xbf16>
    tpu.vector_store %arg5[%c0_7, %c0_8, %c0_9], %12 {strides = array<i32>} : memref<1x16x32xbf16, #tpu.memory_space<vmem>>, vector<1x16x32xbf16>,
    return
  }
  func.func @transform_0(%arg0: i32, %arg1: i32) -> (i32, i32) {
    %c0_i32 = arith.constant 0 : i32
    %c0_i32_0 = arith.constant 0 : i32
    return %arg0, %c0_i32 : i32, i32
  }
  func.func @transform_1(%arg0: i32, %arg1: i32) -> (i32, i32, i32) {
    %c0_i32 = arith.constant 0 : i32
    %c0_i32_0 = arith.constant 0 : i32
    %c0_i32_1 = arith.constant 0 : i32
    return %arg1, %c0_i32, %c0_i32_0 : i32, i32, i32
  }
  func.func @transform_2(%arg0: i32, %arg1: i32) -> (i32, i32, i32) {
    %c0_i32 = arith.constant 0 : i32
    %c0_i32_0 = arith.constant 0 : i32
    %c0_i32_1 = arith.constant 0 : i32
    return %arg1, %c0_i32, %c0_i32_0 : i32, i32, i32
  }
  func.func @transform_3(%arg0: i32, %arg1: i32) -> (i32, i32, i32) {
    %c0_i32 = arith.constant 0 : i32
    %c0_i32_0 = arith.constant 0 : i32
    return %arg1, %arg0, %c0_i32 : i32, i32, i32
  }
}

module attributes {stable_mosaic.version = 11 : i64} {
  func.func @_flash_attn_kernel(%arg0: i32, %arg1: i32, %arg2: i32, %arg3: memref<1x1x8x32xbf16, #tpu.memory_space<vmem>>, %arg4: memref<1x1x8x32xbf16, #tpu.memory_space<vmem>>, %arg5: memref<1x1x8x32xbf16, #tpu.memory_space<vmem>>, %arg6: memref<1x1x8xf32, #tpu.memory_space<vmem>>, %arg7: memref<1x8x32xbf16, #tpu.memory_space<vmem>>, %arg8: memref<8x4xf32, #tpu.memory_space<vmem>>, %arg9: memref<8x4xf32, #tpu.memory_space<vmem>>, %arg10: memref<8x32xf32, #tpu.memory_space<vmem>>) attributes {dimension_semantics = [#tpu.dimension_semantics<parallel>, #tpu.dimension_semantics<parallel>, #tpu.dimension_semantics<arbitrary>], iteration_bounds = array<i64: 2, 1, 1>, scalar_prefetch = 0 : i64, scratch_operands = 3 : i64, tpu.core_type = #tpu.core_type<tc>, window_params = [{transform_indices = @transform_0, window_bounds = array<i64: 1, 1, 8, 32>}, {transform_indices = @transform_1, window_bounds = array<i64: 1, 1, 8, 32>}, {transform_indices = @transform_2, window_bounds = array<i64: 1, 1, 8, 32>}, {transform_indices = @transform_3, window_bounds = array<i64: 1, 1, 8>}, {transform_indices = @transform_4, window_bounds = array<i64: 1, 8, 32>}]} {
    %c0_i32 = arith.constant 0 : i32
    %0 = arith.cmpi eq, %arg2, %c0_i32 : i32
    %1 = arith.extui %0 : i1 to i32
    %c0_i32_0 = arith.constant 0 : i32
    %2 = arith.cmpi ne, %1, %c0_i32_0 : i32
    scf.if %2 {
      %cst_79 = arith.constant 0xFF800000 : f32
      %140 = vector.broadcast %cst_79 : f32 to vector<8x4xf32>
      %c0_80 = arith.constant 0 : index
      %c0_81 = arith.constant 0 : index
      %141 = vector.load %arg8[%c0_80, %c0_81] : memref<8x4xf32, #tpu.memory_space<vmem>>, vector<8x4xf32>
      tpu.vector_store %arg8[%c0_80, %c0_81], %140 {strides = array<i32>} : memref<8x4xf32, #tpu.memory_space<vmem>>, vector<8x4xf32>,
      %cst_82 = arith.constant 0.000000e+00 : f32
      %142 = vector.broadcast %cst_82 : f32 to vector<8x4xf32>
      %c0_83 = arith.constant 0 : index
      %c0_84 = arith.constant 0 : index
      %143 = vector.load %arg9[%c0_83, %c0_84] : memref<8x4xf32, #tpu.memory_space<vmem>>, vector<8x4xf32>
      tpu.vector_store %arg9[%c0_83, %c0_84], %142 {strides = array<i32>} : memref<8x4xf32, #tpu.memory_space<vmem>>, vector<8x4xf32>,
      %cst_85 = arith.constant 0.000000e+00 : f32
      %144 = vector.broadcast %cst_85 : f32 to vector<8x32xf32>
      %c0_86 = arith.constant 0 : index
      %c0_87 = arith.constant 0 : index
      %145 = vector.load %arg10[%c0_86, %c0_87] : memref<8x32xf32, #tpu.memory_space<vmem>>, vector<8x32xf32>
      tpu.vector_store %arg10[%c0_86, %c0_87], %144 {strides = array<i32>} : memref<8x32xf32, #tpu.memory_space<vmem>>, vector<8x32xf32>,
    } else {
    }
    %c0 = arith.constant 0 : index
    %c0_1 = arith.constant 0 : index
    %c0_2 = arith.constant 0 : index
    %c0_3 = arith.constant 0 : index
    %3 = vector.load %arg3[%c0, %c0_1, %c0_2, %c0_3] : memref<1x1x8x32xbf16, #tpu.memory_space<vmem>>, vector<1x1x8x32xbf16>
    %4 = vector.shape_cast %3 : vector<1x1x8x32xbf16> to vector<8x32xbf16>
    %c0_4 = arith.constant 0 : index
    %c0_5 = arith.constant 0 : index
    %c0_6 = arith.constant 0 : index
    %c0_7 = arith.constant 0 : index
    %5 = vector.load %arg4[%c0_4, %c0_5, %c0_6, %c0_7] : memref<1x1x8x32xbf16, #tpu.memory_space<vmem>>, vector<1x1x8x32xbf16>
    %6 = vector.shape_cast %5 : vector<1x1x8x32xbf16> to vector<8x32xbf16>
    %c0_8 = arith.constant 0 : index
    %c0_9 = arith.constant 0 : index
    %c0_10 = arith.constant 0 : index
    %c0_11 = arith.constant 0 : index
    %7 = vector.load %arg5[%c0_8, %c0_9, %c0_10, %c0_11] : memref<1x1x8x32xbf16, #tpu.memory_space<vmem>>, vector<1x1x8x32xbf16>
    %8 = vector.shape_cast %7 : vector<1x1x8x32xbf16> to vector<8x32xbf16>
    %c0_12 = arith.constant 0 : index
    %c0_13 = arith.constant 0 : index
    %c0_14 = arith.constant 0 : index
    %9 = vector.load %arg6[%c0_12, %c0_13, %c0_14] : memref<1x1x8xf32, #tpu.memory_space<vmem>>, vector<1x1x8xf32>
    %10 = vector.shape_cast %9 : vector<1x1x8xf32> to vector<1x8xf32>
    %cst = arith.constant 0.000000e+00 : f32
    %11 = vector.broadcast %cst : f32 to vector<1x8xf32>
    %12 = arith.cmpf ogt, %10, %11 : vector<1x8xf32>
    %13 = vector.extract_strided_slice %4 {offsets = [0, 0], sizes = [8, 8], strides = [1, 1]} : vector<8x32xbf16> to vector<8x8xbf16>
    %14 = vector.extract_strided_slice %6 {offsets = [0, 0], sizes = [8, 8], strides = [1, 1]} : vector<8x32xbf16> to vector<8x8xbf16>
    %cst_15 = arith.constant dense<0.000000e+00> : vector<8x8xf32>
    %15 = tpu.matmul %13, %14, %cst_15 {dimension_numbers = #tpu.dot_dimension_numbers<[1], [1], [0], [0], [0, 0, 1, 0], [], []>} : vector<8x8xbf16>, vector<8x8xbf16>, vector<8x8xf32> -> vector<8x8xf32>
    %cst_16 = arith.constant -1.000000e+09 : f32
    %16 = vector.shape_cast %12 : vector<1x8xi1> to vector<1x8xi1>
    %17 = vector.broadcast %16 : vector<1x8xi1> to vector<8x8xi1>
    %18 = vector.broadcast %cst_16 : f32 to vector<8x8xf32>
    %19 = arith.select %17, %15, %18 : vector<8x8xi1>, vector<8x8xf32>
    %c0_17 = arith.constant 0 : index
    %c0_18 = arith.constant 0 : index
    %20 = vector.load %arg8[%c0_17, %c0_18] : memref<8x4xf32, #tpu.memory_space<vmem>>, vector<8x1xf32>
    %c0_19 = arith.constant 0 : index
    %c0_20 = arith.constant 0 : index
    %21 = vector.load %arg9[%c0_19, %c0_20] : memref<8x4xf32, #tpu.memory_space<vmem>>, vector<8x1xf32>
    %cst_21 = arith.constant dense<0xFF800000> : vector<8xf32>
    %22 = vector.multi_reduction <maximumf>, %19, %cst_21 [1] : vector<8x8xf32> to vector<8xf32>
    %23 = vector.shape_cast %22 : vector<8xf32> to vector<8x1xf32>
    %24 = arith.maximumf %20, %23 : vector<8x1xf32>
    %25 = arith.subf %20, %24 : vector<8x1xf32>
    %26 = math.exp %25 : vector<8x1xf32>
    %27 = vector.broadcast %24 : vector<8x1xf32> to vector<8x8xf32>
    %28 = arith.subf %19, %27 : vector<8x8xf32>
    %29 = math.exp %28 : vector<8x8xf32>
    %30 = arith.mulf %26, %21 : vector<8x1xf32>
    %cst_22 = arith.constant dense<0.000000e+00> : vector<8xf32>
    %31 = vector.multi_reduction <add>, %29, %cst_22 [1] : vector<8x8xf32> to vector<8xf32>
    %32 = vector.shape_cast %31 : vector<8xf32> to vector<8x1xf32>
    %33 = arith.addf %30, %32 : vector<8x1xf32>
    %c0_23 = arith.constant 0 : index
    %c0_24 = arith.constant 0 : index
    %34 = vector.load %arg9[%c0_23, %c0_24] : memref<8x4xf32, #tpu.memory_space<vmem>>, vector<8x1xf32>
    tpu.vector_store %arg9[%c0_23, %c0_24], %33 {strides = array<i32>} : memref<8x4xf32, #tpu.memory_space<vmem>>, vector<8x1xf32>,
    %35 = arith.truncf %29 : vector<8x8xf32> to vector<8x8xbf16>
    %36 = vector.extract_strided_slice %8 {offsets = [0, 0], sizes = [8, 8], strides = [1, 1]} : vector<8x32xbf16> to vector<8x8xbf16>
    %cst_25 = arith.constant dense<0.000000e+00> : vector<8x8xf32>
    %37 = tpu.matmul %35, %36, %cst_25 {dimension_numbers = #tpu.dot_dimension_numbers<[1], [0], [0], [1], [0, 0, 1, 1], [], []>} : vector<8x8xbf16>, vector<8x8xbf16>, vector<8x8xf32> -> vector<8x8xf32>
    %c0_26 = arith.constant 0 : index
    %c0_27 = arith.constant 0 : index
    %38 = vector.load %arg10[%c0_26, %c0_27] : memref<8x32xf32, #tpu.memory_space<vmem>>, vector<8x8xf32>
    %39 = vector.broadcast %26 : vector<8x1xf32> to vector<8x8xf32>
    %40 = arith.mulf %39, %38 : vector<8x8xf32>
    %41 = arith.addf %40, %37 : vector<8x8xf32>
    %c0_28 = arith.constant 0 : index
    %c0_29 = arith.constant 0 : index
    %42 = vector.load %arg10[%c0_28, %c0_29] : memref<8x32xf32, #tpu.memory_space<vmem>>, vector<8x8xf32>
    tpu.vector_store %arg10[%c0_28, %c0_29], %41 {strides = array<i32>} : memref<8x32xf32, #tpu.memory_space<vmem>>, vector<8x8xf32>,
    %c0_30 = arith.constant 0 : index
    %c0_31 = arith.constant 0 : index
    %43 = vector.load %arg8[%c0_30, %c0_31] : memref<8x4xf32, #tpu.memory_space<vmem>>, vector<8x1xf32>
    tpu.vector_store %arg8[%c0_30, %c0_31], %24 {strides = array<i32>} : memref<8x4xf32, #tpu.memory_space<vmem>>, vector<8x1xf32>,
    %44 = vector.extract_strided_slice %4 {offsets = [0, 8], sizes = [8, 8], strides = [1, 1]} : vector<8x32xbf16> to vector<8x8xbf16>
    %45 = vector.extract_strided_slice %6 {offsets = [0, 8], sizes = [8, 8], strides = [1, 1]} : vector<8x32xbf16> to vector<8x8xbf16>
    %cst_32 = arith.constant dense<0.000000e+00> : vector<8x8xf32>
    %46 = tpu.matmul %44, %45, %cst_32 {dimension_numbers = #tpu.dot_dimension_numbers<[1], [1], [0], [0], [0, 0, 1, 0], [], []>} : vector<8x8xbf16>, vector<8x8xbf16>, vector<8x8xf32> -> vector<8x8xf32>
    %cst_33 = arith.constant -1.000000e+09 : f32
    %47 = vector.shape_cast %12 : vector<1x8xi1> to vector<1x8xi1>
    %48 = vector.broadcast %47 : vector<1x8xi1> to vector<8x8xi1>
    %49 = vector.broadcast %cst_33 : f32 to vector<8x8xf32>
    %50 = arith.select %48, %46, %49 : vector<8x8xi1>, vector<8x8xf32>
    %c0_34 = arith.constant 0 : index
    %c1 = arith.constant 1 : index
    %51 = vector.load %arg8[%c0_34, %c1] : memref<8x4xf32, #tpu.memory_space<vmem>>, vector<8x1xf32>
    %c0_35 = arith.constant 0 : index
    %c1_36 = arith.constant 1 : index
    %52 = vector.load %arg9[%c0_35, %c1_36] : memref<8x4xf32, #tpu.memory_space<vmem>>, vector<8x1xf32>
    %cst_37 = arith.constant dense<0xFF800000> : vector<8xf32>
    %53 = vector.multi_reduction <maximumf>, %50, %cst_37 [1] : vector<8x8xf32> to vector<8xf32>
    %54 = vector.shape_cast %53 : vector<8xf32> to vector<8x1xf32>
    %55 = arith.maximumf %51, %54 : vector<8x1xf32>
    %56 = arith.subf %51, %55 : vector<8x1xf32>
    %57 = math.exp %56 : vector<8x1xf32>
    %58 = vector.broadcast %55 : vector<8x1xf32> to vector<8x8xf32>
    %59 = arith.subf %50, %58 : vector<8x8xf32>
    %60 = math.exp %59 : vector<8x8xf32>
    %61 = arith.mulf %57, %52 : vector<8x1xf32>
    %cst_38 = arith.constant dense<0.000000e+00> : vector<8xf32>
    %62 = vector.multi_reduction <add>, %60, %cst_38 [1] : vector<8x8xf32> to vector<8xf32>
    %63 = vector.shape_cast %62 : vector<8xf32> to vector<8x1xf32>
    %64 = arith.addf %61, %63 : vector<8x1xf32>
    %c0_39 = arith.constant 0 : index
    %c1_40 = arith.constant 1 : index
    %65 = vector.load %arg9[%c0_39, %c1_40] : memref<8x4xf32, #tpu.memory_space<vmem>>, vector<8x1xf32>
    tpu.vector_store %arg9[%c0_39, %c1_40], %64 {strides = array<i32>} : memref<8x4xf32, #tpu.memory_space<vmem>>, vector<8x1xf32>,
    %66 = arith.truncf %60 : vector<8x8xf32> to vector<8x8xbf16>
    %67 = vector.extract_strided_slice %8 {offsets = [0, 8], sizes = [8, 8], strides = [1, 1]} : vector<8x32xbf16> to vector<8x8xbf16>
    %cst_41 = arith.constant dense<0.000000e+00> : vector<8x8xf32>
    %68 = tpu.matmul %66, %67, %cst_41 {dimension_numbers = #tpu.dot_dimension_numbers<[1], [0], [0], [1], [0, 0, 1, 1], [], []>} : vector<8x8xbf16>, vector<8x8xbf16>, vector<8x8xf32> -> vector<8x8xf32>
    %c0_42 = arith.constant 0 : index
    %c8 = arith.constant 8 : index
    %69 = vector.load %arg10[%c0_42, %c8] : memref<8x32xf32, #tpu.memory_space<vmem>>, vector<8x8xf32>
    %70 = vector.broadcast %57 : vector<8x1xf32> to vector<8x8xf32>
    %71 = arith.mulf %70, %69 : vector<8x8xf32>
    %72 = arith.addf %71, %68 : vector<8x8xf32>
    %c0_43 = arith.constant 0 : index
    %c8_44 = arith.constant 8 : index
    %73 = vector.load %arg10[%c0_43, %c8_44] : memref<8x32xf32, #tpu.memory_space<vmem>>, vector<8x8xf32>
    tpu.vector_store %arg10[%c0_43, %c8_44], %72 {strides = array<i32>} : memref<8x32xf32, #tpu.memory_space<vmem>>, vector<8x8xf32>,
    %c0_45 = arith.constant 0 : index
    %c1_46 = arith.constant 1 : index
    %74 = vector.load %arg8[%c0_45, %c1_46] : memref<8x4xf32, #tpu.memory_space<vmem>>, vector<8x1xf32>
    tpu.vector_store %arg8[%c0_45, %c1_46], %55 {strides = array<i32>} : memref<8x4xf32, #tpu.memory_space<vmem>>, vector<8x1xf32>,
    %75 = vector.extract_strided_slice %4 {offsets = [0, 16], sizes = [8, 8], strides = [1, 1]} : vector<8x32xbf16> to vector<8x8xbf16>
    %76 = vector.extract_strided_slice %6 {offsets = [0, 16], sizes = [8, 8], strides = [1, 1]} : vector<8x32xbf16> to vector<8x8xbf16>
    %cst_47 = arith.constant dense<0.000000e+00> : vector<8x8xf32>
    %77 = tpu.matmul %75, %76, %cst_47 {dimension_numbers = #tpu.dot_dimension_numbers<[1], [1], [0], [0], [0, 0, 1, 0], [], []>} : vector<8x8xbf16>, vector<8x8xbf16>, vector<8x8xf32> -> vector<8x8xf32>
    %cst_48 = arith.constant -1.000000e+09 : f32
    %78 = vector.shape_cast %12 : vector<1x8xi1> to vector<1x8xi1>
    %79 = vector.broadcast %78 : vector<1x8xi1> to vector<8x8xi1>
    %80 = vector.broadcast %cst_48 : f32 to vector<8x8xf32>
    %81 = arith.select %79, %77, %80 : vector<8x8xi1>, vector<8x8xf32>
    %c0_49 = arith.constant 0 : index
    %c2 = arith.constant 2 : index
    %82 = vector.load %arg8[%c0_49, %c2] : memref<8x4xf32, #tpu.memory_space<vmem>>, vector<8x1xf32>
    %c0_50 = arith.constant 0 : index
    %c2_51 = arith.constant 2 : index
    %83 = vector.load %arg9[%c0_50, %c2_51] : memref<8x4xf32, #tpu.memory_space<vmem>>, vector<8x1xf32>
    %cst_52 = arith.constant dense<0xFF800000> : vector<8xf32>
    %84 = vector.multi_reduction <maximumf>, %81, %cst_52 [1] : vector<8x8xf32> to vector<8xf32>
    %85 = vector.shape_cast %84 : vector<8xf32> to vector<8x1xf32>
    %86 = arith.maximumf %82, %85 : vector<8x1xf32>
    %87 = arith.subf %82, %86 : vector<8x1xf32>
    %88 = math.exp %87 : vector<8x1xf32>
    %89 = vector.broadcast %86 : vector<8x1xf32> to vector<8x8xf32>
    %90 = arith.subf %81, %89 : vector<8x8xf32>
    %91 = math.exp %90 : vector<8x8xf32>
    %92 = arith.mulf %88, %83 : vector<8x1xf32>
    %cst_53 = arith.constant dense<0.000000e+00> : vector<8xf32>
    %93 = vector.multi_reduction <add>, %91, %cst_53 [1] : vector<8x8xf32> to vector<8xf32>
    %94 = vector.shape_cast %93 : vector<8xf32> to vector<8x1xf32>
    %95 = arith.addf %92, %94 : vector<8x1xf32>
    %c0_54 = arith.constant 0 : index
    %c2_55 = arith.constant 2 : index
    %96 = vector.load %arg9[%c0_54, %c2_55] : memref<8x4xf32, #tpu.memory_space<vmem>>, vector<8x1xf32>
    tpu.vector_store %arg9[%c0_54, %c2_55], %95 {strides = array<i32>} : memref<8x4xf32, #tpu.memory_space<vmem>>, vector<8x1xf32>,
    %97 = arith.truncf %91 : vector<8x8xf32> to vector<8x8xbf16>
    %98 = vector.extract_strided_slice %8 {offsets = [0, 16], sizes = [8, 8], strides = [1, 1]} : vector<8x32xbf16> to vector<8x8xbf16>
    %cst_56 = arith.constant dense<0.000000e+00> : vector<8x8xf32>
    %99 = tpu.matmul %97, %98, %cst_56 {dimension_numbers = #tpu.dot_dimension_numbers<[1], [0], [0], [1], [0, 0, 1, 1], [], []>} : vector<8x8xbf16>, vector<8x8xbf16>, vector<8x8xf32> -> vector<8x8xf32>
    %c0_57 = arith.constant 0 : index
    %c16 = arith.constant 16 : index
    %100 = vector.load %arg10[%c0_57, %c16] : memref<8x32xf32, #tpu.memory_space<vmem>>, vector<8x8xf32>
    %101 = vector.broadcast %88 : vector<8x1xf32> to vector<8x8xf32>
    %102 = arith.mulf %101, %100 : vector<8x8xf32>
    %103 = arith.addf %102, %99 : vector<8x8xf32>
    %c0_58 = arith.constant 0 : index
    %c16_59 = arith.constant 16 : index
    %104 = vector.load %arg10[%c0_58, %c16_59] : memref<8x32xf32, #tpu.memory_space<vmem>>, vector<8x8xf32>
    tpu.vector_store %arg10[%c0_58, %c16_59], %103 {strides = array<i32>} : memref<8x32xf32, #tpu.memory_space<vmem>>, vector<8x8xf32>,
    %c0_60 = arith.constant 0 : index
    %c2_61 = arith.constant 2 : index
    %105 = vector.load %arg8[%c0_60, %c2_61] : memref<8x4xf32, #tpu.memory_space<vmem>>, vector<8x1xf32>
    tpu.vector_store %arg8[%c0_60, %c2_61], %86 {strides = array<i32>} : memref<8x4xf32, #tpu.memory_space<vmem>>, vector<8x1xf32>,
    %106 = vector.extract_strided_slice %4 {offsets = [0, 24], sizes = [8, 8], strides = [1, 1]} : vector<8x32xbf16> to vector<8x8xbf16>
    %107 = vector.extract_strided_slice %6 {offsets = [0, 24], sizes = [8, 8], strides = [1, 1]} : vector<8x32xbf16> to vector<8x8xbf16>
    %cst_62 = arith.constant dense<0.000000e+00> : vector<8x8xf32>
    %108 = tpu.matmul %106, %107, %cst_62 {dimension_numbers = #tpu.dot_dimension_numbers<[1], [1], [0], [0], [0, 0, 1, 0], [], []>} : vector<8x8xbf16>, vector<8x8xbf16>, vector<8x8xf32> -> vector<8x8xf32>
    %cst_63 = arith.constant -1.000000e+09 : f32
    %109 = vector.shape_cast %12 : vector<1x8xi1> to vector<1x8xi1>
    %110 = vector.broadcast %109 : vector<1x8xi1> to vector<8x8xi1>
    %111 = vector.broadcast %cst_63 : f32 to vector<8x8xf32>
    %112 = arith.select %110, %108, %111 : vector<8x8xi1>, vector<8x8xf32>
    %c0_64 = arith.constant 0 : index
    %c3 = arith.constant 3 : index
    %113 = vector.load %arg8[%c0_64, %c3] : memref<8x4xf32, #tpu.memory_space<vmem>>, vector<8x1xf32>
    %c0_65 = arith.constant 0 : index
    %c3_66 = arith.constant 3 : index
    %114 = vector.load %arg9[%c0_65, %c3_66] : memref<8x4xf32, #tpu.memory_space<vmem>>, vector<8x1xf32>
    %cst_67 = arith.constant dense<0xFF800000> : vector<8xf32>
    %115 = vector.multi_reduction <maximumf>, %112, %cst_67 [1] : vector<8x8xf32> to vector<8xf32>
    %116 = vector.shape_cast %115 : vector<8xf32> to vector<8x1xf32>
    %117 = arith.maximumf %113, %116 : vector<8x1xf32>
    %118 = arith.subf %113, %117 : vector<8x1xf32>
    %119 = math.exp %118 : vector<8x1xf32>
    %120 = vector.broadcast %117 : vector<8x1xf32> to vector<8x8xf32>
    %121 = arith.subf %112, %120 : vector<8x8xf32>
    %122 = math.exp %121 : vector<8x8xf32>
    %123 = arith.mulf %119, %114 : vector<8x1xf32>
    %cst_68 = arith.constant dense<0.000000e+00> : vector<8xf32>
    %124 = vector.multi_reduction <add>, %122, %cst_68 [1] : vector<8x8xf32> to vector<8xf32>
    %125 = vector.shape_cast %124 : vector<8xf32> to vector<8x1xf32>
    %126 = arith.addf %123, %125 : vector<8x1xf32>
    %c0_69 = arith.constant 0 : index
    %c3_70 = arith.constant 3 : index
    %127 = vector.load %arg9[%c0_69, %c3_70] : memref<8x4xf32, #tpu.memory_space<vmem>>, vector<8x1xf32>
    tpu.vector_store %arg9[%c0_69, %c3_70], %126 {strides = array<i32>} : memref<8x4xf32, #tpu.memory_space<vmem>>, vector<8x1xf32>,
    %128 = arith.truncf %122 : vector<8x8xf32> to vector<8x8xbf16>
    %129 = vector.extract_strided_slice %8 {offsets = [0, 24], sizes = [8, 8], strides = [1, 1]} : vector<8x32xbf16> to vector<8x8xbf16>
    %cst_71 = arith.constant dense<0.000000e+00> : vector<8x8xf32>
    %130 = tpu.matmul %128, %129, %cst_71 {dimension_numbers = #tpu.dot_dimension_numbers<[1], [0], [0], [1], [0, 0, 1, 1], [], []>} : vector<8x8xbf16>, vector<8x8xbf16>, vector<8x8xf32> -> vector<8x8xf32>
    %c0_72 = arith.constant 0 : index
    %c24 = arith.constant 24 : index
    %131 = vector.load %arg10[%c0_72, %c24] : memref<8x32xf32, #tpu.memory_space<vmem>>, vector<8x8xf32>
    %132 = vector.broadcast %119 : vector<8x1xf32> to vector<8x8xf32>
    %133 = arith.mulf %132, %131 : vector<8x8xf32>
    %134 = arith.addf %133, %130 : vector<8x8xf32>
    %c0_73 = arith.constant 0 : index
    %c24_74 = arith.constant 24 : index
    %135 = vector.load %arg10[%c0_73, %c24_74] : memref<8x32xf32, #tpu.memory_space<vmem>>, vector<8x8xf32>
    tpu.vector_store %arg10[%c0_73, %c24_74], %134 {strides = array<i32>} : memref<8x32xf32, #tpu.memory_space<vmem>>, vector<8x8xf32>,
    %c0_75 = arith.constant 0 : index
    %c3_76 = arith.constant 3 : index
    %136 = vector.load %arg8[%c0_75, %c3_76] : memref<8x4xf32, #tpu.memory_space<vmem>>, vector<8x1xf32>
    tpu.vector_store %arg8[%c0_75, %c3_76], %117 {strides = array<i32>} : memref<8x4xf32, #tpu.memory_space<vmem>>, vector<8x1xf32>,
    %c0_i32_77 = arith.constant 0 : i32
    %137 = arith.cmpi eq, %arg2, %c0_i32_77 : i32
    %138 = arith.extui %137 : i1 to i32
    %c0_i32_78 = arith.constant 0 : i32
    %139 = arith.cmpi ne, %138, %c0_i32_78 : i32
    scf.if %139 {
      %c0_79 = arith.constant 0 : index
      %c0_80 = arith.constant 0 : index
      %140 = vector.load %arg9[%c0_79, %c0_80] : memref<8x4xf32, #tpu.memory_space<vmem>>, vector<8x1xf32>
      %141 = tpu.reciprocal %140 {approx = true} : vector<8x1xf32> -> vector<8x1xf32>
      %c0_81 = arith.constant 0 : index
      %c0_82 = arith.constant 0 : index
      %142 = vector.load %arg10[%c0_81, %c0_82] : memref<8x32xf32, #tpu.memory_space<vmem>>, vector<8x8xf32>
      %143 = vector.broadcast %141 : vector<8x1xf32> to vector<8x8xf32>
      %144 = arith.mulf %142, %143 : vector<8x8xf32>
      %c0_83 = arith.constant 0 : index
      %c0_84 = arith.constant 0 : index
      %145 = vector.load %arg10[%c0_83, %c0_84] : memref<8x32xf32, #tpu.memory_space<vmem>>, vector<8x8xf32>
      tpu.vector_store %arg10[%c0_83, %c0_84], %144 {strides = array<i32>} : memref<8x32xf32, #tpu.memory_space<vmem>>, vector<8x8xf32>,
      %c0_85 = arith.constant 0 : index
      %c1_86 = arith.constant 1 : index
      %146 = vector.load %arg9[%c0_85, %c1_86] : memref<8x4xf32, #tpu.memory_space<vmem>>, vector<8x1xf32>
      %147 = tpu.reciprocal %146 {approx = true} : vector<8x1xf32> -> vector<8x1xf32>
      %c0_87 = arith.constant 0 : index
      %c8_88 = arith.constant 8 : index
      %148 = vector.load %arg10[%c0_87, %c8_88] : memref<8x32xf32, #tpu.memory_space<vmem>>, vector<8x8xf32>
      %149 = vector.broadcast %147 : vector<8x1xf32> to vector<8x8xf32>
      %150 = arith.mulf %148, %149 : vector<8x8xf32>
      %c0_89 = arith.constant 0 : index
      %c8_90 = arith.constant 8 : index
      %151 = vector.load %arg10[%c0_89, %c8_90] : memref<8x32xf32, #tpu.memory_space<vmem>>, vector<8x8xf32>
      tpu.vector_store %arg10[%c0_89, %c8_90], %150 {strides = array<i32>} : memref<8x32xf32, #tpu.memory_space<vmem>>, vector<8x8xf32>,
      %c0_91 = arith.constant 0 : index
      %c2_92 = arith.constant 2 : index
      %152 = vector.load %arg9[%c0_91, %c2_92] : memref<8x4xf32, #tpu.memory_space<vmem>>, vector<8x1xf32>
      %153 = tpu.reciprocal %152 {approx = true} : vector<8x1xf32> -> vector<8x1xf32>
      %c0_93 = arith.constant 0 : index
      %c16_94 = arith.constant 16 : index
      %154 = vector.load %arg10[%c0_93, %c16_94] : memref<8x32xf32, #tpu.memory_space<vmem>>, vector<8x8xf32>
      %155 = vector.broadcast %153 : vector<8x1xf32> to vector<8x8xf32>
      %156 = arith.mulf %154, %155 : vector<8x8xf32>
      %c0_95 = arith.constant 0 : index
      %c16_96 = arith.constant 16 : index
      %157 = vector.load %arg10[%c0_95, %c16_96] : memref<8x32xf32, #tpu.memory_space<vmem>>, vector<8x8xf32>
      tpu.vector_store %arg10[%c0_95, %c16_96], %156 {strides = array<i32>} : memref<8x32xf32, #tpu.memory_space<vmem>>, vector<8x8xf32>,
      %c0_97 = arith.constant 0 : index
      %c3_98 = arith.constant 3 : index
      %158 = vector.load %arg9[%c0_97, %c3_98] : memref<8x4xf32, #tpu.memory_space<vmem>>, vector<8x1xf32>
      %159 = tpu.reciprocal %158 {approx = true} : vector<8x1xf32> -> vector<8x1xf32>
      %c0_99 = arith.constant 0 : index
      %c24_100 = arith.constant 24 : index
      %160 = vector.load %arg10[%c0_99, %c24_100] : memref<8x32xf32, #tpu.memory_space<vmem>>, vector<8x8xf32>
      %161 = vector.broadcast %159 : vector<8x1xf32> to vector<8x8xf32>
      %162 = arith.mulf %160, %161 : vector<8x8xf32>
      %c0_101 = arith.constant 0 : index
      %c24_102 = arith.constant 24 : index
      %163 = vector.load %arg10[%c0_101, %c24_102] : memref<8x32xf32, #tpu.memory_space<vmem>>, vector<8x8xf32>
      tpu.vector_store %arg10[%c0_101, %c24_102], %162 {strides = array<i32>} : memref<8x32xf32, #tpu.memory_space<vmem>>, vector<8x8xf32>,
      %c0_103 = arith.constant 0 : index
      %c0_104 = arith.constant 0 : index
      %164 = vector.load %arg10[%c0_103, %c0_104] : memref<8x32xf32, #tpu.memory_space<vmem>>, vector<8x32xf32>
      %165 = arith.truncf %164 : vector<8x32xf32> to vector<8x32xbf16>
      %c0_105 = arith.constant 0 : index
      %c0_106 = arith.constant 0 : index
      %c0_107 = arith.constant 0 : index
      %166 = vector.load %arg7[%c0_105, %c0_106, %c0_107] : memref<1x8x32xbf16, #tpu.memory_space<vmem>>, vector<1x8x32xbf16>
      %167 = vector.shape_cast %166 : vector<1x8x32xbf16> to vector<8x32xbf16>
      %168 = vector.shape_cast %165 : vector<8x32xbf16> to vector<1x8x32xbf16>
      tpu.vector_store %arg7[%c0_105, %c0_106, %c0_107], %168 {strides = array<i32>} : memref<1x8x32xbf16, #tpu.memory_space<vmem>>, vector<1x8x32xbf16>,
    } else {
    }
    return
  }
  func.func @transform_0(%arg0: i32, %arg1: i32, %arg2: i32) -> (i32, i32, i32, i32) {
    %c0_i32 = arith.constant 0 : i32
    %c0_i32_0 = arith.constant 0 : i32
    %c0_i32_1 = arith.constant 0 : i32
    return %c0_i32, %arg0, %arg1, %c0_i32_0 : i32, i32, i32, i32
  }
  func.func @transform_1(%arg0: i32, %arg1: i32, %arg2: i32) -> (i32, i32, i32, i32) {
    %c1_i32 = arith.constant 1 : i32
    %c0_i32 = arith.constant 0 : i32
    %c0_i32_0 = arith.constant 0 : i32
    return %c1_i32, %arg0, %arg2, %c0_i32 : i32, i32, i32, i32
  }
  func.func @transform_2(%arg0: i32, %arg1: i32, %arg2: i32) -> (i32, i32, i32, i32) {
    %c2_i32 = arith.constant 2 : i32
    %c0_i32 = arith.constant 0 : i32
    %c0_i32_0 = arith.constant 0 : i32
    return %c2_i32, %arg0, %arg2, %c0_i32 : i32, i32, i32, i32
  }
  func.func @transform_3(%arg0: i32, %arg1: i32, %arg2: i32) -> (i32, i32, i32) {
    %c0_i32 = arith.constant 0 : i32
    %c0_i32_0 = arith.constant 0 : i32
    return %arg0, %c0_i32, %arg2 : i32, i32, i32
  }
  func.func @transform_4(%arg0: i32, %arg1: i32, %arg2: i32) -> (i32, i32, i32) {
    %c0_i32 = arith.constant 0 : i32
    %c0_i32_0 = arith.constant 0 : i32
    return %arg0, %arg1, %c0_i32 : i32, i32, i32
  }
}

module attributes {stable_mosaic.version = 11 : i64} {
  func.func @_add_ln_kernel(%arg0: i32, %arg1: memref<16x32xf32, #tpu.memory_space<vmem>>, %arg2: memref<16x32xbf16, #tpu.memory_space<vmem>>, %arg3: memref<16x32xf32, #tpu.memory_space<vmem>>) attributes {dimension_semantics = [#tpu.dimension_semantics<parallel>], iteration_bounds = array<i64: 1>, scalar_prefetch = 0 : i64, scratch_operands = 0 : i64, tpu.core_type = #tpu.core_type<tc>, window_params = [{transform_indices = @transform_0, window_bounds = array<i64: 16, 32>}, {transform_indices = @transform_1, window_bounds = array<i64: 16, 32>}, {transform_indices = @transform_2, window_bounds = array<i64: 16, 32>}]} {
    %c0 = arith.constant 0 : index
    %c0_0 = arith.constant 0 : index
    %0 = vector.load %arg1[%c0, %c0_0] : memref<16x32xf32, #tpu.memory_space<vmem>>, vector<16x32xf32>
    %c0_1 = arith.constant 0 : index
    %c0_2 = arith.constant 0 : index
    %1 = vector.load %arg2[%c0_1, %c0_2] : memref<16x32xbf16, #tpu.memory_space<vmem>>, vector<16x32xbf16>
    %2 = arith.extf %1 : vector<16x32xbf16> to vector<16x32xf32>
    %3 = arith.addf %0, %2 : vector<16x32xf32>
    %cst = arith.constant dense<0.000000e+00> : vector<16xf32>
    %4 = vector.multi_reduction <add>, %3, %cst [1] : vector<16x32xf32> to vector<16xf32>
    %5 = vector.shape_cast %4 : vector<16xf32> to vector<16x1xf32>
    %cst_3 = arith.constant 3.200000e+01 : f32
    %6 = vector.broadcast %cst_3 : f32 to vector<16x1xf32>
    %7 = arith.divf %5, %6 : vector<16x1xf32>
    %8 = vector.broadcast %7 : vector<16x1xf32> to vector<16x32xf32>
    %9 = arith.subf %3, %8 : vector<16x32xf32>
    %10 = arith.mulf %9, %9 : vector<16x32xf32>
    %cst_4 = arith.constant dense<0.000000e+00> : vector<16xf32>
    %11 = vector.multi_reduction <add>, %10, %cst_4 [1] : vector<16x32xf32> to vector<16xf32>
    %12 = vector.shape_cast %11 : vector<16xf32> to vector<16x1xf32>
    %cst_5 = arith.constant 3.200000e+01 : f32
    %13 = vector.broadcast %cst_5 : f32 to vector<16x1xf32>
    %14 = arith.divf %12, %13 : vector<16x1xf32>
    %cst_6 = arith.constant 9.99999974E-6 : f32
    %15 = vector.broadcast %cst_6 : f32 to vector<16x1xf32>
    %16 = arith.addf %14, %15 : vector<16x1xf32>
    %17 = math.rsqrt %16 : vector<16x1xf32>
    %18 = vector.broadcast %17 : vector<16x1xf32> to vector<16x32xf32>
    %19 = arith.mulf %9, %18 : vector<16x32xf32>
    %c0_7 = arith.constant 0 : index
    %c0_8 = arith.constant 0 : index
    %20 = vector.load %arg3[%c0_7, %c0_8] : memref<16x32xf32, #tpu.memory_space<vmem>>, vector<16x32xf32>
    tpu.vector_store %arg3[%c0_7, %c0_8], %19 {strides = array<i32>} : memref<16x32xf32, #tpu.memory_space<vmem>>, vector<16x32xf32>,
    return
  }
  func.func @transform_0(%arg0: i32) -> (i32, i32) {
    %c0_i32 = arith.constant 0 : i32
    %c0_i32_0 = arith.constant 0 : i32
    return %arg0, %c0_i32 : i32, i32
  }
  func.func @transform_1(%arg0: i32) -> (i32, i32) {
    %c0_i32 = arith.constant 0 : i32
    %c0_i32_0 = arith.constant 0 : i32
    return %arg0, %c0_i32 : i32, i32
  }
  func.func @transform_2(%arg0: i32) -> (i32, i32) {
    %c0_i32 = arith.constant 0 : i32
    %c0_i32_0 = arith.constant 0 : i32
    return %arg0, %c0_i32 : i32, i32
  }
}

module attributes {stable_mosaic.version = 11 : i64} {
  func.func @_ffn_res_ln_kernel(%arg0: i32, %arg1: i32, %arg2: memref<16x32xf32, #tpu.memory_space<vmem>>, %arg3: memref<32x64xbf16, #tpu.memory_space<vmem>>, %arg4: memref<1x64xf32, #tpu.memory_space<vmem>>, %arg5: memref<64x32xbf16, #tpu.memory_space<vmem>>, %arg6: memref<1x32xf32, #tpu.memory_space<vmem>>, %arg7: memref<16x32xf32, #tpu.memory_space<vmem>>, %arg8: memref<16x32xf32, #tpu.memory_space<vmem>>) attributes {dimension_semantics = [#tpu.dimension_semantics<parallel>, #tpu.dimension_semantics<arbitrary>], iteration_bounds = array<i64: 1, 1>, scalar_prefetch = 0 : i64, scratch_operands = 1 : i64, tpu.core_type = #tpu.core_type<tc>, window_params = [{transform_indices = @transform_0, window_bounds = array<i64: 16, 32>}, {transform_indices = @transform_1, window_bounds = array<i64: 32, 64>}, {transform_indices = @transform_2, window_bounds = array<i64: 1, 64>}, {transform_indices = @transform_3, window_bounds = array<i64: 64, 32>}, {pipeline_mode = #tpu.pipeline_mode<synchronous>, transform_indices = @transform_4, window_bounds = array<i64: 1, 32>}, {transform_indices = @transform_5, window_bounds = array<i64: 16, 32>}]} {
    %c0_i32 = arith.constant 0 : i32
    %0 = arith.cmpi eq, %arg1, %c0_i32 : i32
    %1 = arith.extui %0 : i1 to i32
    %c0_i32_0 = arith.constant 0 : i32
    %2 = arith.cmpi ne, %1, %c0_i32_0 : i32
    scf.if %2 {
      %cst_16 = arith.constant 0.000000e+00 : f32
      %21 = vector.broadcast %cst_16 : f32 to vector<16x32xf32>
      %c0_17 = arith.constant 0 : index
      %c0_18 = arith.constant 0 : index
      %22 = vector.load %arg8[%c0_17, %c0_18] : memref<16x32xf32, #tpu.memory_space<vmem>>, vector<16x32xf32>
      tpu.vector_store %arg8[%c0_17, %c0_18], %21 {strides = array<i32>} : memref<16x32xf32, #tpu.memory_space<vmem>>, vector<16x32xf32>,
    } else {
    }
    %c0 = arith.constant 0 : index
    %c0_1 = arith.constant 0 : index
    %3 = vector.load %arg2[%c0, %c0_1] : memref<16x32xf32, #tpu.memory_space<vmem>>, vector<16x32xf32>
    %4 = arith.truncf %3 : vector<16x32xf32> to vector<16x32xbf16>
    %c0_2 = arith.constant 0 : index
    %c0_3 = arith.constant 0 : index
    %5 = vector.load %arg3[%c0_2, %c0_3] : memref<32x64xbf16, #tpu.memory_space<vmem>>, vector<32x64xbf16>
    %cst = arith.constant dense<0.000000e+00> : vector<16x64xf32>
    %6 = tpu.matmul %4, %5, %cst {dimension_numbers = #tpu.dot_dimension_numbers<[1], [0], [0], [1], [0, 0, 1, 1], [], []>} : vector<16x32xbf16>, vector<32x64xbf16>, vector<16x64xf32> -> vector<16x64xf32>
    %c0_4 = arith.constant 0 : index
    %c0_5 = arith.constant 0 : index
    %7 = vector.load %arg4[%c0_4, %c0_5] : memref<1x64xf32, #tpu.memory_space<vmem>>, vector<1x64xf32>
    %8 = vector.broadcast %7 : vector<1x64xf32> to vector<16x64xf32>
    %9 = arith.addf %6, %8 : vector<16x64xf32>
    %cst_6 = arith.constant 0.000000e+00 : f32
    %10 = vector.broadcast %cst_6 : f32 to vector<16x64xf32>
    %11 = arith.maximumf %9, %10 : vector<16x64xf32>
    %c0_7 = arith.constant 0 : index
    %c0_8 = arith.constant 0 : index
    %12 = vector.load %arg8[%c0_7, %c0_8] : memref<16x32xf32, #tpu.memory_space<vmem>>, vector<16x32xf32>
    %13 = arith.truncf %11 : vector<16x64xf32> to vector<16x64xbf16>
    %c0_9 = arith.constant 0 : index
    %c0_10 = arith.constant 0 : index
    %14 = vector.load %arg5[%c0_9, %c0_10] : memref<64x32xbf16, #tpu.memory_space<vmem>>, vector<64x32xbf16>
    %cst_11 = arith.constant dense<0.000000e+00> : vector<16x32xf32>
    %15 = tpu.matmul %13, %14, %cst_11 {dimension_numbers = #tpu.dot_dimension_numbers<[1], [0], [0], [1], [0, 0, 1, 1], [], []>} : vector<16x64xbf16>, vector<64x32xbf16>, vector<16x32xf32> -> vector<16x32xf32>
    %16 = arith.addf %12, %15 : vector<16x32xf32>
    %c0_12 = arith.constant 0 : index
    %c0_13 = arith.constant 0 : index
    %17 = vector.load %arg8[%c0_12, %c0_13] : memref<16x32xf32, #tpu.memory_space<vmem>>, vector<16x32xf32>
    tpu.vector_store %arg8[%c0_12, %c0_13], %16 {strides = array<i32>} : memref<16x32xf32, #tpu.memory_space<vmem>>, vector<16x32xf32>,
    %c0_i32_14 = arith.constant 0 : i32
    %18 = arith.cmpi eq, %arg1, %c0_i32_14 : i32
    %19 = arith.extui %18 : i1 to i32
    %c0_i32_15 = arith.constant 0 : i32
    %20 = arith.cmpi ne, %19, %c0_i32_15 : i32
    scf.if %20 {
      %c0_16 = arith.constant 0 : index
      %c0_17 = arith.constant 0 : index
      %21 = vector.load %arg8[%c0_16, %c0_17] : memref<16x32xf32, #tpu.memory_space<vmem>>, vector<16x32xf32>
      %c0_18 = arith.constant 0 : index
      %c0_19 = arith.constant 0 : index
      %22 = vector.load %arg6[%c0_18, %c0_19] : memref<1x32xf32, #tpu.memory_space<vmem>>, vector<1x32xf32>
      %23 = vector.broadcast %22 : vector<1x32xf32> to vector<16x32xf32>
      %24 = arith.addf %21, %23 : vector<16x32xf32>
      %c0_20 = arith.constant 0 : index
      %c0_21 = arith.constant 0 : index
      %25 = vector.load %arg2[%c0_20, %c0_21] : memref<16x32xf32, #tpu.memory_space<vmem>>, vector<16x32xf32>
      %26 = arith.addf %24, %25 : vector<16x32xf32>
      %cst_22 = arith.constant dense<0.000000e+00> : vector<16xf32>
      %27 = vector.multi_reduction <add>, %26, %cst_22 [1] : vector<16x32xf32> to vector<16xf32>
      %28 = vector.shape_cast %27 : vector<16xf32> to vector<16x1xf32>
      %cst_23 = arith.constant 3.200000e+01 : f32
      %29 = vector.broadcast %cst_23 : f32 to vector<16x1xf32>
      %30 = arith.divf %28, %29 : vector<16x1xf32>
      %31 = vector.broadcast %30 : vector<16x1xf32> to vector<16x32xf32>
      %32 = arith.subf %26, %31 : vector<16x32xf32>
      %33 = arith.mulf %32, %32 : vector<16x32xf32>
      %cst_24 = arith.constant dense<0.000000e+00> : vector<16xf32>
      %34 = vector.multi_reduction <add>, %33, %cst_24 [1] : vector<16x32xf32> to vector<16xf32>
      %35 = vector.shape_cast %34 : vector<16xf32> to vector<16x1xf32>
      %cst_25 = arith.constant 3.200000e+01 : f32
      %36 = vector.broadcast %cst_25 : f32 to vector<16x1xf32>
      %37 = arith.divf %35, %36 : vector<16x1xf32>
      %cst_26 = arith.constant 9.99999974E-6 : f32
      %38 = vector.broadcast %cst_26 : f32 to vector<16x1xf32>
      %39 = arith.addf %37, %38 : vector<16x1xf32>
      %40 = math.rsqrt %39 : vector<16x1xf32>
      %41 = vector.broadcast %40 : vector<16x1xf32> to vector<16x32xf32>
      %42 = arith.mulf %32, %41 : vector<16x32xf32>
      %c0_27 = arith.constant 0 : index
      %c0_28 = arith.constant 0 : index
      %43 = vector.load %arg7[%c0_27, %c0_28] : memref<16x32xf32, #tpu.memory_space<vmem>>, vector<16x32xf32>
      tpu.vector_store %arg7[%c0_27, %c0_28], %42 {strides = array<i32>} : memref<16x32xf32, #tpu.memory_space<vmem>>, vector<16x32xf32>,
    } else {
    }
    return
  }
  func.func @transform_0(%arg0: i32, %arg1: i32) -> (i32, i32) {
    %c0_i32 = arith.constant 0 : i32
    %c0_i32_0 = arith.constant 0 : i32
    return %arg0, %c0_i32 : i32, i32
  }
  func.func @transform_1(%arg0: i32, %arg1: i32) -> (i32, i32) {
    %c0_i32 = arith.constant 0 : i32
    %c0_i32_0 = arith.constant 0 : i32
    return %c0_i32, %arg1 : i32, i32
  }
  func.func @transform_2(%arg0: i32, %arg1: i32) -> (i32, i32) {
    %c0_i32 = arith.constant 0 : i32
    %c0_i32_0 = arith.constant 0 : i32
    return %c0_i32, %arg1 : i32, i32
  }
  func.func @transform_3(%arg0: i32, %arg1: i32) -> (i32, i32) {
    %c0_i32 = arith.constant 0 : i32
    %c0_i32_0 = arith.constant 0 : i32
    return %arg1, %c0_i32 : i32, i32
  }
  func.func @transform_4(%arg0: i32, %arg1: i32) -> (i32, i32) {
    %c0_i32 = arith.constant 0 : i32
    %c0_i32_0 = arith.constant 0 : i32
    %c0_i32_1 = arith.constant 0 : i32
    return %c0_i32, %c0_i32_0 : i32, i32
  }
  func.func @transform_5(%arg0: i32, %arg1: i32) -> (i32, i32) {
    %c0_i32 = arith.constant 0 : i32
    %c0_i32_0 = arith.constant 0 : i32
    return %arg0, %c0_i32 : i32, i32
  }
}

</mosaic_0001>

<llo_original>
// kernel: encoder_layer.4
$region0: #{encoder_layer.4}
  #allocation0 [shape = 'u32[]', space=smem, size = 0x4, offset = 0x4, fixed_abs, tag = 'smem constant byte address 0x4 - core index']
  #allocation1 [shape = 'u32[144,128]{1,0:T(1,128)}', space=vmem, size = 0x12000, scoped, tag = 'internal scratch']
  %s0 = inlined_call_operand.vmem [shape: f32[16,32], index: 0, kind: input, shape index: {}]
  %s1 = inlined_call_operand.vmem [shape: bf16[3,32,32], index: 1, kind: input, shape index: {}]
  %s2 = inlined_call_operand.vmem [shape: f32[3,1,32], index: 2, kind: input, shape index: {}]
  %s3 = inlined_call_operand.vmem [shape: bf16[3,16,32], index: 3, kind: output, shape index: {}]
  %s4 = sld [smem:[#allocation0]]
  $region45: #{encoder_layer.4} parent=0
    _
  %s6 = ssub.s32 1, %s4
  %s7 = scalar_select 0, %s6, %s4
  loop: start=0, step=1, limit=5
  $region2: #{encoder_layer.4} parent=0 // loop_pre_header
    _
  $region3: #{encoder_layer.4} parent=0 // loop_header
    %s9 = sphi 0, %s13
    %p10 = scmp.ge.s32.totalorder %s9, 5
    %s16 = sphi 0, %s28
    %s17 = sphi 0, %s24
    %s18 = sphi 0, %s16
    %s19 = sphi 0, %s17
    %s20 = sphi 0, %s18
    %s21 = sphi 0, %s19
    %s31 = sphi 0, %s33
    %s34 = sphi 0, %s31
    %s35 = sphi 0, %s34
    %s51 = sphi 0, %s35
    %s57 = sphi 0, %s59
    %s60 = sphi 0, %s57
    %s61 = sphi 0, %s60
    %s77 = sphi 0, %s61
    %s83 = sphi 0, %s85
    %s86 = sphi 0, %s83
    %s87 = sphi 0, %s86
    %s103 = sphi 0, %s87
    %s111 = sphi 0, %s113
    %s114 = sphi 0, %s111
    %s115 = sphi 0, %s114
    %s131 = sphi 0, %s115
  $region4: #{encoder_layer.4} parent=0 // loop_header_branch
    %12 = sbr.rel (%p10) target = $region8
  $region5: #{encoder_layer.4} parent=0 // loop_body
    %s14 = ssub.s32 %s9, 1
    %s15 = ssub.s32 %s9, 2
    %s22 = sadd.s32 1, %s17
    %p23 = scmp.ge.s32.totalorder %s22, 3
    %s24 = scalar_select %p23, 0, %s22
    %s25 = sadd.s32 1, %s16
    %s26 = scalar_select %p23, %s25, %s16
    %p27 = scmp.ge.s32.totalorder %s26, 1
    %s28 = scalar_select %p27, 0, %s26
    %s29 = ssub.s32 %s16, %s28
    %p30 = scmp.eq.s32.totalorder %s29, 0
    %s32 = sadd.s32 %s31, 1
    %s33 = scalar_select %p30, %s31, %s32
    %p36 = pneg %p30
    %p37 = scmp.eq.s32.totalorder %s9, 2
    %p38 = por %p36, %p37
    %p39 = scmp.ne.s32.totalorder %s31, %s34
    %p40 = scmp.eq.s32.totalorder %s9, 0
    %p41 = por %p39, %p40
    %p42 = scmp.ne.s32.totalorder %s31, %s34
    %p43 = scmp.eq.s32.totalorder %s14, 2
    %p44 = por %p42, %p43
    %p45 = scmp.ne.s32.totalorder %s34, %s35
    %p46 = scmp.eq.s32.totalorder %s14, 0
    %p47 = por %p45, %p46
    %p48 = scmp.ne.s32.totalorder %s34, %s35
    %p49 = scmp.eq.s32.totalorder %s15, 2
    %p50 = por %p48, %p49
    %p52 = scmp.ne.s32.totalorder %s35, %s51
    %p53 = scmp.eq.s32.totalorder %s15, 0
    %p54 = por %p52, %p53
    %s55 = ssub.s32 %s17, %s24
    %p56 = scmp.eq.s32.totalorder %s55, 0
    %s58 = sadd.s32 %s57, 1
    %s59 = scalar_select %p56, %s57, %s58
    %p62 = pneg %p56
    %p63 = scmp.eq.s32.totalorder %s9, 2
    %p64 = por %p62, %p63
    %p65 = scmp.ne.s32.totalorder %s57, %s60
    %p66 = scmp.eq.s32.totalorder %s9, 0
    %p67 = por %p65, %p66
    %p68 = scmp.ne.s32.totalorder %s57, %s60
    %p69 = scmp.eq.s32.totalorder %s14, 2
    %p70 = por %p68, %p69
    %p71 = scmp.ne.s32.totalorder %s60, %s61
    %p72 = scmp.eq.s32.totalorder %s14, 0
    %p73 = por %p71, %p72
    %p74 = scmp.ne.s32.totalorder %s60, %s61
    %p75 = scmp.eq.s32.totalorder %s15, 2
    %p76 = por %p74, %p75
    %p78 = scmp.ne.s32.totalorder %s61, %s77
    %p79 = scmp.eq.s32.totalorder %s15, 0
    %p80 = por %p78, %p79
    %s81 = ssub.s32 %s17, %s24
    %p82 = scmp.eq.s32.totalorder %s81, 0
    %s84 = sadd.s32 %s83, 1
    %s85 = scalar_select %p82, %s83, %s84
    %p88 = pneg %p82
    %p89 = scmp.eq.s32.totalorder %s9, 2
    %p90 = por %p88, %p89
    %p91 = scmp.ne.s32.totalorder %s83, %s86
    %p92 = scmp.eq.s32.totalorder %s9, 0
    %p93 = por %p91, %p92
    %p94 = scmp.ne.s32.totalorder %s83, %s86
    %p95 = scmp.eq.s32.totalorder %s14, 2
    %p96 = por %p94, %p95
    %p97 = scmp.ne.s32.totalorder %s86, %s87
    %p98 = scmp.eq.s32.totalorder %s14, 0
    %p99 = por %p97, %p98
    %p100 = scmp.ne.s32.totalorder %s86, %s87
    %p101 = scmp.eq.s32.totalorder %s15, 2
    %p102 = por %p100, %p101
    %p104 = scmp.ne.s32.totalorder %s87, %s103
    %p105 = scmp.eq.s32.totalorder %s15, 0
    %p106 = por %p104, %p105
    %s107 = ssub.s32 %s17, %s24
    %s108 = ssub.s32 %s16, %s28
    %s109 = sor.u32 %s107, %s108
    %p110 = scmp.eq.s32.totalorder %s109, 0
    %s112 = sadd.s32 %s111, 1
    %s113 = scalar_select %p110, %s111, %s112
    %p116 = pneg %p110
    %p117 = scmp.eq.s32.totalorder %s9, 2
    %p118 = por %p116, %p117
    %p119 = scmp.ne.s32.totalorder %s111, %s114
    %p120 = scmp.eq.s32.totalorder %s9, 0
    %p121 = por %p119, %p120
    %p122 = scmp.ne.s32.totalorder %s111, %s114
    %p123 = scmp.eq.s32.totalorder %s14, 2
    %p124 = por %p122, %p123
    %p125 = scmp.ne.s32.totalorder %s114, %s115
    %p126 = scmp.eq.s32.totalorder %s14, 0
    %p127 = por %p125, %p126
    %p128 = scmp.ne.s32.totalorder %s114, %s115
    %p129 = scmp.eq.s32.totalorder %s15, 2
    %p130 = por %p128, %p129
    %p132 = scmp.ne.s32.totalorder %s115, %s131
    %p133 = scmp.eq.s32.totalorder %s15, 0
    %p134 = por %p132, %p133
    %p135 = scmp.le.s32.totalorder 1, %s9
    %p136 = scmp.lt.s32.totalorder %s9, 4
    %p137 = pnand %p135, %p136
    %p138 = pneg %p137
    // Predicated region
    $region9: #{encoder_layer.4} parent=5 // pred_check
      _
    $region10: #{encoder_layer.4} parent=5 // pred_check_branch
      %140 = sbr.rel (%p137) target = $region12
    $region11: #{encoder_layer.4} parent=5 // pred_region
      %s141 = ssub.s32 %s9, 1
      // Predicated region
      $region13: #{encoder_layer.4} parent=11 // pred_check
        %p142 = pneg %p47
      $region14: #{encoder_layer.4} parent=11 // pred_check_branch
        %144 = sbr.rel (%p142) target = $region16
      $region15: #{encoder_layer.4} parent=11 // pred_region
        %s145 = smul.u32 2, %s18
        %p146 = scmp.lt.s32.totalorder %s145, 1
        %s147 = scalar_select %p146, %s145, 1
        %s148 = smul.addr %s147, 8
        %s149 = scalar_lea.vmem %s0, %s148
        %s150 = smul.u32 2, %s18
      $region16: #{encoder_layer.4} parent=11 // pred_fallthru
        _
    $region12: #{encoder_layer.4} parent=5 // pred_fallthru
      _
    %p151 = scmp.lt.s32.totalorder %s9, 3
    // Predicated region
    $region17: #{encoder_layer.4} parent=5 // pred_check
      %p152 = pneg %p151
    $region18: #{encoder_layer.4} parent=5 // pred_check_branch
      %154 = sbr.rel (%p152) target = $region20
    $region19: #{encoder_layer.4} parent=5 // pred_region
      // Predicated region
      $region21: #{encoder_layer.4} parent=19 // pred_check
        %p155 = pneg %p67
      $region22: #{encoder_layer.4} parent=19 // pred_check_branch
        %157 = sbr.rel (%p155) target = $region24
      $region23: #{encoder_layer.4} parent=19 // pred_region
        %p158 = scmp.lt.s32.totalorder %s17, 2
        %s159 = scalar_select %p158, %s17, 2
        %s160 = smul.addr %s159, 4
        %s161 = smul.addr %s160, 4
        %s162 = scalar_lea.vmem %s1, %s161
      $region24: #{encoder_layer.4} parent=19 // pred_fallthru
        _
      // Predicated region
      $region25: #{encoder_layer.4} parent=19 // pred_check
        %p163 = pneg %p93
      $region26: #{encoder_layer.4} parent=19 // pred_check_branch
        %165 = sbr.rel (%p163) target = $region28
      $region27: #{encoder_layer.4} parent=19 // pred_region
        %p166 = scmp.lt.s32.totalorder %s17, 2
        %s167 = scalar_select %p166, %s17, 2
        %s168 = scalar_lea.vmem %s2, %s167
      $region28: #{encoder_layer.4} parent=19 // pred_fallthru
        _
    $region20: #{encoder_layer.4} parent=5 // pred_fallthru
      _
    %p169 = scmp.le.s32.totalorder 1, %s9
    %p170 = scmp.lt.s32.totalorder %s9, 4
    %p171 = pnand %p169, %p170
    %p172 = pneg %p171
    // Predicated region
    $region29: #{encoder_layer.4} parent=5 // pred_check
      _
    $region30: #{encoder_layer.4} parent=5 // pred_check_branch
      %174 = sbr.rel (%p171) target = $region32
    $region31: #{encoder_layer.4} parent=5 // pred_region
      %s175 = ssub.s32 %s9, 1
      %s176 = smul.u32 2, %s18
      %p177 = scmp.lt.s32.totalorder %s176, 1
      %s178 = scalar_select %p177, %s176, 1
      %s179 = smul.addr %s178, 8
      %s180 = scalar_lea.vmem %s0, %s179
      %p181 = pneg %p47
      %p182 = pneg %p44
      %p183 = scmp.lt.s32.totalorder %s19, 2
      %s184 = scalar_select %p183, %s19, 2
      %s185 = smul.addr %s184, 4
      %s186 = smul.addr %s185, 4
      %s187 = scalar_lea.vmem %s1, %s186
      %p188 = pneg %p73
      %p189 = pneg %p70
      %p190 = scmp.lt.s32.totalorder %s19, 2
      %s191 = scalar_select %p190, %s19, 2
      %s192 = scalar_lea.vmem %s2, %s191
      %p193 = pneg %p99
      %p194 = pneg %p96
      %p195 = pneg %p127
      %p196 = pneg %p124
      %s197 = smul.u32 2, %s18
      %p198 = scmp.lt.s32.totalorder %s19, 2
      %s199 = scalar_select %p198, %s19, 2
      %p200 = scmp.lt.s32.totalorder %s197, 1
      %s201 = scalar_select %p200, %s197, 1
      %s202 = smul.addr %s199, 2
      %s203 = sadd.s32 %s201, %s202
      %s204 = smul.addr %s203, 4
      %s205 = scalar_lea.vmem %s3, %s204
      %s206 = smul.u32 2, %s18
      %p207 = scmp.lt.s32.totalorder %s206, 1
      %s208 = scalar_select %p207, %s206, 1
      %s209 = smul.addr %s208, 8
      %s210 = scalar_lea.vmem %s0, %s209
      %s211 = smul.u32 2, %s18
      %p212 = scmp.lt.s32.totalorder %s19, 2
      %s213 = scalar_select %p212, %s19, 2
      %s214 = smul.addr %s213, 4
      %s215 = smul.addr %s214, 4
      %s216 = scalar_lea.vmem %s1, %s215
      %p217 = scmp.lt.s32.totalorder %s19, 2
      %s218 = scalar_select %p217, %s19, 2
      %s219 = scalar_lea.vmem %s2, %s218
      %s220 = smul.u32 2, %s18
      %p221 = scmp.lt.s32.totalorder %s19, 2
      %s222 = scalar_select %p221, %s19, 2
      %p223 = scmp.lt.s32.totalorder %s220, 1
      %s224 = scalar_select %p223, %s220, 1
      %s225 = smul.addr %s222, 2
      %s226 = sadd.s32 %s224, %s225
      %s227 = smul.addr %s226, 4
      %s228 = scalar_lea.vmem %s3, %s227
      %s229 = smul.u32 2, %s18
      %v231 = vld [vmem:[%s210] sm:$0xff]
      %v232 = vld [vmem:[%s210 + $0x8] sm:$0xff]
      %v233 = vpack.c.bf16 %v232, %v231
      %v234 = vld [vmem:[%s216] sm:$0xf]
      %v235 = vld [vmem:[%s216 + $0x4] sm:$0xf]
      %v236 = vld [vmem:[%s216 + $0x8] sm:$0xf]
      %v237 = vld [vmem:[%s216 + $0xc] sm:$0xf]
      %v238 = vld [vmem:[%s219] sm:$0x1]
      %v240 = vlaneseq
      %v241 = vshrl.u32 %v240, 7
      %v242 = vsub.s32 0, %v241
      %v243 = vrot.slane %v238, %v242
      %v249 = vunpack.c.l.b16 %v234
      %v250 = vunpack.c.l.b16 %v235
      %v251 = vunpack.c.l.b16 %v236
      %v252 = vunpack.c.l.b16 %v237
      %v253 = vpack.c.b16 %v250, %v249
      %v254 = vpack.c.b16 %v252, %v251
      %vm257 = vcmask 261120
      %v259 = vsel %vm257, %v233, 0
      %261 = vmatprep.subr.bf16.mxu0 0
      %262 = vmatpush1.bf16.msra.mxu0 0
      %263 = vmatprep.subr.bf16.mxu0 0
      %264 = vmatpush1.bf16.msra.mxu0 0
      %265 = vmatprep.subr.bf16.mxu0 0
      %266 = vmatpush1.bf16.msra.mxu0 0
      %267 = vmatprep.subr.bf16.mxu0 0
      %268 = vmatpush1.bf16.msra.mxu0 0
      %269 = vmatprep.subr.bf16.mxu0 0
      %270 = vmatpush1.bf16.msra.mxu0 0
      %271 = vmatprep.subr.bf16.mxu0 0
      %272 = vmatpush1.bf16.msra.mxu0 0
      %273 = vmatprep.subr.bf16.mxu0 0
      %274 = vmatpush1.bf16.msra.mxu0 %v254
      %275 = vmatprep.subr.bf16.mxu0 0
      %276 = vmatpush1.bf16.msra.mxu0 %v253
      %277 = vmatprep.subr.bf16.mxu0 0
      %278 = vmatpush2.bf16.msra.mxu0 0
      %279 = vmatprep.subr.bf16.mxu0 0
      %280 = vmatpush2.bf16.msra.mxu0 0
      %281 = vmatprep.subr.bf16.mxu0 0
      %282 = vmatpush2.bf16.msra.mxu0 0
      %283 = vmatprep.subr.bf16.mxu0 0
      %284 = vmatpush2.bf16.msra.mxu0 0
      %285 = vmatprep.subr.bf16.mxu0 0
      %286 = vmatpush2.bf16.msra.mxu0 0
      %287 = vmatprep.subr.bf16.mxu0 0
      %288 = vmatpush2.bf16.msra.mxu0 0
      %289 = vmatprep.subr.bf16.mxu0 0
      %290 = vmatpush2.bf16.msra.mxu0 0
      %291 = vmatprep.subr.bf16.mxu0 0
      %292 = vmatpush2.bf16.msra.mxu0 0
      %293 = vmatprep.mubr.bf16.mxu0 0
      %294 = vmatmul.mubr.bf16.gmra.mxu0 %v259
      %v295 = vpop.f32.mrf.mxu0
      %v296 = vadd.f32 %v243, %v295
      %v297 = vpop.f32.mrf.mxu0
      %v298 = vpop.f32.mrf.mxu0
      %v299 = vadd.f32 %v243, %v298
      %v300 = vpop.f32.mrf.mxu0
      %301 = vdwg.mxu0
      %v302 = vpack.c.bf16 %v299, %v296
      %v304 = vunpack.c.l.b16 %v302
      %v305 = vunpack.c.h.b16 %v302
      %v306 = vpack.c.b16 %v304, %v304
      %v307 = vpack.c.b16 %v305, %v305
      %vm310 = vcmask 257024
      %311 = vst.msk [vmem:[%s228] sm:$0xf] %vm310, %v306
      %312 = vst.msk [vmem:[%s228 + $0x4] sm:$0xf] %vm310, %v307
      %s313 = smul.u32 2, %s18
      %p314 = scmp.lt.s32.totalorder %s19, 2
      %s315 = scalar_select %p314, %s19, 2
      %p316 = scmp.lt.s32.totalorder %s313, 1
      %s317 = scalar_select %p316, %s313, 1
      %s318 = smul.addr %s315, 2
      %s319 = sadd.s32 %s317, %s318
      %s320 = smul.addr %s319, 4
      %s321 = scalar_lea.vmem %s3, %s320
      // Predicated region
      $region33: #{encoder_layer.4} parent=31 // pred_check
        %p322 = pneg %p124
      $region34: #{encoder_layer.4} parent=31 // pred_check_branch
        %324 = sbr.rel (%p322) target = $region36
      $region35: #{encoder_layer.4} parent=31 // pred_region
        %s325 = smul.u32 2, %s18
      $region36: #{encoder_layer.4} parent=31 // pred_fallthru
        _
    $region32: #{encoder_layer.4} parent=5 // pred_fallthru
      _
    %p326 = scmp.le.s32.totalorder 2, %s9
    // Predicated region
    $region37: #{encoder_layer.4} parent=5 // pred_check
      %p327 = pneg %p326
    $region38: #{encoder_layer.4} parent=5 // pred_check_branch
      %329 = sbr.rel (%p327) target = $region40
    $region39: #{encoder_layer.4} parent=5 // pred_region
      %s330 = ssub.s32 %s9, 2
      // Predicated region
      $region41: #{encoder_layer.4} parent=39 // pred_check
        %p331 = pneg %p130
      $region42: #{encoder_layer.4} parent=39 // pred_check_branch
        %333 = sbr.rel (%p331) target = $region44
      $region43: #{encoder_layer.4} parent=39 // pred_region
        %s334 = smul.u32 2, %s20
        %p335 = scmp.lt.s32.totalorder %s21, 2
        %s336 = scalar_select %p335, %s21, 2
        %p337 = scmp.lt.s32.totalorder %s334, 1
        %s338 = scalar_select %p337, %s334, 1
        %s339 = smul.addr %s336, 2
        %s340 = sadd.s32 %s338, %s339
        %s341 = smul.addr %s340, 4
        %s342 = scalar_lea.vmem %s3, %s341
      $region44: #{encoder_layer.4} parent=39 // pred_fallthru
        _
    $region40: #{encoder_layer.4} parent=5 // pred_fallthru
      _
  $region6: #{encoder_layer.4} parent=0 // loop_footer
    %s13 = sadd.s32 1, %s9
  $region7: #{encoder_layer.4} parent=0 // loop_footer_branch
    %8 = sbr.rel target = $region3
  $region8: #{encoder_layer.4} parent=0 // loop_exit
    _

// kernel: encoder_layer.6
$region0: #{encoder_layer.6}
  #allocation0 [shape = 'u32[]', space=smem, size = 0x4, offset = 0x4, fixed_abs, tag = 'smem constant byte address 0x4 - core index']
  #allocation1 [shape = 'u32[144,128]{1,0:T(1,128)}', space=vmem, size = 0x12000, scoped, tag = 'internal scratch']
  %s0 = inlined_call_operand.vmem [shape: f32[16,32], index: 0, kind: input, shape index: {}]
  %s1 = inlined_call_operand.vmem [shape: bf16[16,32], index: 1, kind: input, shape index: {}]
  %s2 = inlined_call_operand.vmem [shape: f32[16,32], index: 2, kind: output, shape index: {}]
  %s3 = sld [smem:[#allocation0]]
  $region18: #{encoder_layer.6} parent=0
    _
  %s5 = ssub.s32 1, %s3
  %s6 = scalar_select 0, %s5, %s3
  // Predicated region
  $region2: #{encoder_layer.6} parent=0 // pred_check
    _
  $region3: #{encoder_layer.6} parent=0 // pred_check_branch
    %8 = sbr.rel (0) target = $region5
  $region4: #{encoder_layer.6} parent=0 // pred_region
    _
  $region5: #{encoder_layer.6} parent=0 // pred_fallthru
    _
  // Predicated region
  $region6: #{encoder_layer.6} parent=0 // pred_check
    _
  $region7: #{encoder_layer.6} parent=0 // pred_check_branch
    %10 = sbr.rel (0) target = $region9
  $region8: #{encoder_layer.6} parent=0 // pred_region
    _
  $region9: #{encoder_layer.6} parent=0 // pred_fallthru
    _
  %v11 = vld [vmem:[%s0] sm:$0xff]
  %v12 = vld [vmem:[%s0 + $0x8] sm:$0xff]
  %v13 = vld [vmem:[%s1] sm:$0xf]
  %v14 = vld [vmem:[%s1 + $0x4] sm:$0xf]
  %v15 = vunpack.c.l.bf16 %v13
  %v16 = vunpack.c.l.bf16 %v14
  %v17 = vadd.f32 %v11, %v15
  %v18 = vadd.f32 %v12, %v16
  %vm19 = vcmask 261120
  %v20 = vsel %vm19, %v17, 0.0
  %21 = vadd.xlane.f32.xlu0 %v20
  %v22 = vpop.xlane.xlu0 %21
  %v23 = vsel %vm19, %v18, 0.0
  %24 = vadd.xlane.f32.xlu0 %v23
  %v25 = vpop.xlane.xlu0 %24
  %v26 = vrcp.pop 32.0
  %v27 = vmul.f32 %v22, %v26
  %v28 = vmul.f32 %v25, %v26
  %v29 = vsub.f32 %v17, %v27
  %v30 = vsub.f32 %v18, %v28
  %v31 = vmul.f32 %v29, %v29
  %v32 = vmul.f32 %v30, %v30
  %v33 = vsel %vm19, %v31, 0.0
  %34 = vadd.xlane.f32.xlu0 %v33
  %v35 = vpop.xlane.xlu0 %34
  %v36 = vsel %vm19, %v32, 0.0
  %37 = vadd.xlane.f32.xlu0 %v36
  %v38 = vpop.xlane.xlu0 %37
  %v39 = vmul.f32 %v35, %v26
  %v40 = vmul.f32 %v38, %v26
  %v41 = vadd.f32 %v39, 1e-05
  %v42 = vadd.f32 %v40, 1e-05
  %v43 = vrsqrt.pop %v41
  %v44 = vrsqrt.pop %v42
  %v45 = vmul.f32 %v29, %v43
  %v46 = vmul.f32 %v30, %v44
  %47 = vst.msk [vmem:[%s2] sm:$0xff] %vm19, %v45
  %48 = vst.msk [vmem:[%s2 + $0x8] sm:$0xff] %vm19, %v46
  // Predicated region
  $region10: #{encoder_layer.6} parent=0 // pred_check
    _
  $region11: #{encoder_layer.6} parent=0 // pred_check_branch
    %50 = sbr.rel (0) target = $region13
  $region12: #{encoder_layer.6} parent=0 // pred_region
    _
  $region13: #{encoder_layer.6} parent=0 // pred_fallthru
    _
  // Predicated region
  $region14: #{encoder_layer.6} parent=0 // pred_check
    _
  $region15: #{encoder_layer.6} parent=0 // pred_check_branch
    %52 = sbr.rel (0) target = $region17
  $region16: #{encoder_layer.6} parent=0 // pred_region
    _
  $region17: #{encoder_layer.6} parent=0 // pred_fallthru
    _

// kernel: encoder_layer.5
$region0: #{encoder_layer.5}
  #allocation0 [shape = 'u32[]', space=smem, size = 0x4, offset = 0x4, fixed_abs, tag = 'smem constant byte address 0x4 - core index']
  #allocation1 [shape = 'u32[144,128]{1,0:T(1,128)}', space=vmem, size = 0x12000, scoped, tag = 'internal scratch']
  #allocation2 [shape = 'f32[8,4]{1,0:T(8,128)}', space=vmem, size = 0x1000, scoped, tag = 'scratch operand']
  #allocation3 [shape = 'f32[8,4]{1,0:T(8,128)}', space=vmem, size = 0x1000, scoped, tag = 'scratch operand']
  #allocation4 [shape = 'f32[8,32]{1,0:T(8,128)}', space=vmem, size = 0x1000, scoped, tag = 'scratch operand']
  %s0 = inlined_call_operand.vmem [shape: bf16[3,2,8,32], index: 0, kind: input, shape index: {}, may-alias: {0,1,2}]
  %s1 = inlined_call_operand.vmem [shape: bf16[3,2,8,32], index: 1, kind: input, shape index: {}, may-alias: {0,1,2}]
  %s2 = inlined_call_operand.vmem [shape: bf16[3,2,8,32], index: 2, kind: input, shape index: {}, may-alias: {0,1,2}]
  %s3 = inlined_call_operand.vmem [shape: f32[2,1,8], index: 3, kind: input, shape index: {}]
  %s4 = inlined_call_operand.vmem [shape: bf16[2,8,32], index: 4, kind: output, shape index: {}]
  %s5 = sld [smem:[#allocation0]]
  $region57: #{encoder_layer.5} parent=0
    _
  %s7 = ssub.s32 1, %s5
  %s8 = scalar_select 0, %s7, %s5
  loop: start=0, step=1, limit=4
  $region2: #{encoder_layer.5} parent=0 // loop_pre_header
    _
  $region3: #{encoder_layer.5} parent=0 // loop_header
    %s10 = sphi 0, %s14
    %p11 = scmp.ge.s32.totalorder %s10, 4
    %s17 = sphi 0, %s36
    %s18 = sphi 0, %s32
    %s19 = sphi 0, %s28
    %s20 = sphi 0, %s17
    %s21 = sphi 0, %s18
    %s22 = sphi 0, %s19
    %s23 = sphi 0, %s20
    %s24 = sphi 0, %s21
    %s25 = sphi 0, %s22
    %s41 = sphi 0, %s43
    %s44 = sphi 0, %s41
    %s45 = sphi 0, %s44
    %s61 = sphi 0, %s45
    %s69 = sphi 0, %s71
    %s72 = sphi 0, %s69
    %s73 = sphi 0, %s72
    %s89 = sphi 0, %s73
    %s97 = sphi 0, %s99
    %s100 = sphi 0, %s97
    %s101 = sphi 0, %s100
    %s117 = sphi 0, %s101
    %s125 = sphi 0, %s127
    %s128 = sphi 0, %s125
    %s129 = sphi 0, %s128
    %s145 = sphi 0, %s129
    %s153 = sphi 0, %s155
    %s156 = sphi 0, %s153
    %s157 = sphi 0, %s156
    %s173 = sphi 0, %s157
  $region4: #{encoder_layer.5} parent=0 // loop_header_branch
    %13 = sbr.rel (%p11) target = $region8
  $region5: #{encoder_layer.5} parent=0 // loop_body
    %s15 = ssub.s32 %s10, 1
    %s16 = ssub.s32 %s10, 2
    %s26 = sadd.s32 1, %s19
    %p27 = scmp.ge.s32.totalorder %s26, 1
    %s28 = scalar_select %p27, 0, %s26
    %s29 = sadd.s32 1, %s18
    %s30 = scalar_select %p27, %s29, %s18
    %p31 = scmp.ge.s32.totalorder %s30, 1
    %s32 = scalar_select %p31, 0, %s30
    %s33 = sadd.s32 1, %s17
    %s34 = scalar_select %p31, %s33, %s17
    %p35 = scmp.ge.s32.totalorder %s34, 2
    %s36 = scalar_select %p35, 0, %s34
    %s37 = ssub.s32 %s17, %s36
    %s38 = ssub.s32 %s18, %s32
    %s39 = sor.u32 %s37, %s38
    %p40 = scmp.eq.s32.totalorder %s39, 0
    %s42 = sadd.s32 %s41, 1
    %s43 = scalar_select %p40, %s41, %s42
    %p46 = pneg %p40
    %p47 = scmp.eq.s32.totalorder %s10, 1
    %p48 = por %p46, %p47
    %p49 = scmp.ne.s32.totalorder %s41, %s44
    %p50 = scmp.eq.s32.totalorder %s10, 0
    %p51 = por %p49, %p50
    %p52 = scmp.ne.s32.totalorder %s41, %s44
    %p53 = scmp.eq.s32.totalorder %s15, 1
    %p54 = por %p52, %p53
    %p55 = scmp.ne.s32.totalorder %s44, %s45
    %p56 = scmp.eq.s32.totalorder %s15, 0
    %p57 = por %p55, %p56
    %p58 = scmp.ne.s32.totalorder %s44, %s45
    %p59 = scmp.eq.s32.totalorder %s16, 1
    %p60 = por %p58, %p59
    %p62 = scmp.ne.s32.totalorder %s45, %s61
    %p63 = scmp.eq.s32.totalorder %s16, 0
    %p64 = por %p62, %p63
    %s65 = ssub.s32 %s17, %s36
    %s66 = ssub.s32 %s19, %s28
    %s67 = sor.u32 %s65, %s66
    %p68 = scmp.eq.s32.totalorder %s67, 0
    %s70 = sadd.s32 %s69, 1
    %s71 = scalar_select %p68, %s69, %s70
    %p74 = pneg %p68
    %p75 = scmp.eq.s32.totalorder %s10, 1
    %p76 = por %p74, %p75
    %p77 = scmp.ne.s32.totalorder %s69, %s72
    %p78 = scmp.eq.s32.totalorder %s10, 0
    %p79 = por %p77, %p78
    %p80 = scmp.ne.s32.totalorder %s69, %s72
    %p81 = scmp.eq.s32.totalorder %s15, 1
    %p82 = por %p80, %p81
    %p83 = scmp.ne.s32.totalorder %s72, %s73
    %p84 = scmp.eq.s32.totalorder %s15, 0
    %p85 = por %p83, %p84
    %p86 = scmp.ne.s32.totalorder %s72, %s73
    %p87 = scmp.eq.s32.totalorder %s16, 1
    %p88 = por %p86, %p87
    %p90 = scmp.ne.s32.totalorder %s73, %s89
    %p91 = scmp.eq.s32.totalorder %s16, 0
    %p92 = por %p90, %p91
    %s93 = ssub.s32 %s17, %s36
    %s94 = ssub.s32 %s19, %s28
    %s95 = sor.u32 %s93, %s94
    %p96 = scmp.eq.s32.totalorder %s95, 0
    %s98 = sadd.s32 %s97, 1
    %s99 = scalar_select %p96, %s97, %s98
    %p102 = pneg %p96
    %p103 = scmp.eq.s32.totalorder %s10, 1
    %p104 = por %p102, %p103
    %p105 = scmp.ne.s32.totalorder %s97, %s100
    %p106 = scmp.eq.s32.totalorder %s10, 0
    %p107 = por %p105, %p106
    %p108 = scmp.ne.s32.totalorder %s97, %s100
    %p109 = scmp.eq.s32.totalorder %s15, 1
    %p110 = por %p108, %p109
    %p111 = scmp.ne.s32.totalorder %s100, %s101
    %p112 = scmp.eq.s32.totalorder %s15, 0
    %p113 = por %p111, %p112
    %p114 = scmp.ne.s32.totalorder %s100, %s101
    %p115 = scmp.eq.s32.totalorder %s16, 1
    %p116 = por %p114, %p115
    %p118 = scmp.ne.s32.totalorder %s101, %s117
    %p119 = scmp.eq.s32.totalorder %s16, 0
    %p120 = por %p118, %p119
    %s121 = ssub.s32 %s17, %s36
    %s122 = ssub.s32 %s19, %s28
    %s123 = sor.u32 %s121, %s122
    %p124 = scmp.eq.s32.totalorder %s123, 0
    %s126 = sadd.s32 %s125, 1
    %s127 = scalar_select %p124, %s125, %s126
    %p130 = pneg %p124
    %p131 = scmp.eq.s32.totalorder %s10, 1
    %p132 = por %p130, %p131
    %p133 = scmp.ne.s32.totalorder %s125, %s128
    %p134 = scmp.eq.s32.totalorder %s10, 0
    %p135 = por %p133, %p134
    %p136 = scmp.ne.s32.totalorder %s125, %s128
    %p137 = scmp.eq.s32.totalorder %s15, 1
    %p138 = por %p136, %p137
    %p139 = scmp.ne.s32.totalorder %s128, %s129
    %p140 = scmp.eq.s32.totalorder %s15, 0
    %p141 = por %p139, %p140
    %p142 = scmp.ne.s32.totalorder %s128, %s129
    %p143 = scmp.eq.s32.totalorder %s16, 1
    %p144 = por %p142, %p143
    %p146 = scmp.ne.s32.totalorder %s129, %s145
    %p147 = scmp.eq.s32.totalorder %s16, 0
    %p148 = por %p146, %p147
    %s149 = ssub.s32 %s17, %s36
    %s150 = ssub.s32 %s18, %s32
    %s151 = sor.u32 %s149, %s150
    %p152 = scmp.eq.s32.totalorder %s151, 0
    %s154 = sadd.s32 %s153, 1
    %s155 = scalar_select %p152, %s153, %s154
    %p158 = pneg %p152
    %p159 = scmp.eq.s32.totalorder %s10, 1
    %p160 = por %p158, %p159
    %p161 = scmp.ne.s32.totalorder %s153, %s156
    %p162 = scmp.eq.s32.totalorder %s10, 0
    %p163 = por %p161, %p162
    %p164 = scmp.ne.s32.totalorder %s153, %s156
    %p165 = scmp.eq.s32.totalorder %s15, 1
    %p166 = por %p164, %p165
    %p167 = scmp.ne.s32.totalorder %s156, %s157
    %p168 = scmp.eq.s32.totalorder %s15, 0
    %p169 = por %p167, %p168
    %p170 = scmp.ne.s32.totalorder %s156, %s157
    %p171 = scmp.eq.s32.totalorder %s16, 1
    %p172 = por %p170, %p171
    %p174 = scmp.ne.s32.totalorder %s157, %s173
    %p175 = scmp.eq.s32.totalorder %s16, 0
    %p176 = por %p174, %p175
    %p177 = scmp.le.s32.totalorder 1, %s10
    %p178 = scmp.lt.s32.totalorder %s10, 3
    %p179 = pnand %p177, %p178
    %p180 = pneg %p179
    // Predicated region
    $region9: #{encoder_layer.5} parent=5 // pred_check
      _
    $region10: #{encoder_layer.5} parent=5 // pred_check_branch
      %182 = sbr.rel (%p179) target = $region12
    $region11: #{encoder_layer.5} parent=5 // pred_region
      %s183 = ssub.s32 %s10, 1
    $region12: #{encoder_layer.5} parent=5 // pred_fallthru
      _
    %p184 = scmp.lt.s32.totalorder %s10, 2
    // Predicated region
    $region13: #{encoder_layer.5} parent=5 // pred_check
      %p185 = pneg %p184
    $region14: #{encoder_layer.5} parent=5 // pred_check_branch
      %187 = sbr.rel (%p185) target = $region16
    $region15: #{encoder_layer.5} parent=5 // pred_region
      // Predicated region
      $region17: #{encoder_layer.5} parent=15 // pred_check
        %p188 = pneg %p51
      $region18: #{encoder_layer.5} parent=15 // pred_check_branch
        %190 = sbr.rel (%p188) target = $region20
      $region19: #{encoder_layer.5} parent=15 // pred_region
        %p191 = scmp.lt.s32.totalorder %s17, 1
        %s192 = scalar_select %p191, %s17, 1
        %p193 = scmp.lt.s32.totalorder %s18, 0
        %s194 = scalar_select %p193, %s18, 0
        %s195 = sadd.s32 %s194, %s192
        %s196 = smul.addr %s195, 4
        %s197 = scalar_lea.vmem %s0, %s196
      $region20: #{encoder_layer.5} parent=15 // pred_fallthru
        _
      // Predicated region
      $region21: #{encoder_layer.5} parent=15 // pred_check
        %p198 = pneg %p79
      $region22: #{encoder_layer.5} parent=15 // pred_check_branch
        %200 = sbr.rel (%p198) target = $region24
      $region23: #{encoder_layer.5} parent=15 // pred_region
        %p201 = scmp.lt.s32.totalorder %s17, 1
        %s202 = scalar_select %p201, %s17, 1
        %p203 = scmp.lt.s32.totalorder %s19, 0
        %s204 = scalar_select %p203, %s19, 0
        %s205 = sadd.s32 %s204, %s202
        %s206 = sadd.s32 %s205, 2
        %s207 = smul.addr %s206, 4
        %s208 = scalar_lea.vmem %s1, %s207
      $region24: #{encoder_layer.5} parent=15 // pred_fallthru
        _
      // Predicated region
      $region25: #{encoder_layer.5} parent=15 // pred_check
        %p209 = pneg %p107
      $region26: #{encoder_layer.5} parent=15 // pred_check_branch
        %211 = sbr.rel (%p209) target = $region28
      $region27: #{encoder_layer.5} parent=15 // pred_region
        %p212 = scmp.lt.s32.totalorder %s17, 1
        %s213 = scalar_select %p212, %s17, 1
        %p214 = scmp.lt.s32.totalorder %s19, 0
        %s215 = scalar_select %p214, %s19, 0
        %s216 = sadd.s32 %s215, %s213
        %s217 = sadd.s32 %s216, 4
        %s218 = smul.addr %s217, 4
        %s219 = scalar_lea.vmem %s2, %s218
      $region28: #{encoder_layer.5} parent=15 // pred_fallthru
        _
      // Predicated region
      $region29: #{encoder_layer.5} parent=15 // pred_check
        %p220 = pneg %p135
      $region30: #{encoder_layer.5} parent=15 // pred_check_branch
        %222 = sbr.rel (%p220) target = $region32
      $region31: #{encoder_layer.5} parent=15 // pred_region
        %p223 = scmp.lt.s32.totalorder %s17, 1
        %s224 = scalar_select %p223, %s17, 1
        %p225 = scmp.lt.s32.totalorder %s19, 0
        %s226 = scalar_select %p225, %s19, 0
        %s227 = sadd.s32 %s226, %s224
        %s228 = scalar_lea.vmem %s3, %s227
      $region32: #{encoder_layer.5} parent=15 // pred_fallthru
        _
    $region16: #{encoder_layer.5} parent=5 // pred_fallthru
      _
    %p229 = scmp.le.s32.totalorder 1, %s10
    %p230 = scmp.lt.s32.totalorder %s10, 3
    %p231 = pnand %p229, %p230
    %p232 = pneg %p231
    // Predicated region
    $region33: #{encoder_layer.5} parent=5 // pred_check
      _
    $region34: #{encoder_layer.5} parent=5 // pred_check_branch
      %234 = sbr.rel (%p231) target = $region36
    $region35: #{encoder_layer.5} parent=5 // pred_region
      %s235 = ssub.s32 %s10, 1
      %p236 = scmp.lt.s32.totalorder %s20, 1
      %s237 = scalar_select %p236, %s20, 1
      %p238 = scmp.lt.s32.totalorder %s21, 0
      %s239 = scalar_select %p238, %s21, 0
      %s240 = sadd.s32 %s239, %s237
      %s241 = smul.addr %s240, 4
      %s242 = scalar_lea.vmem %s0, %s241
      %p243 = pneg %p57
      %p244 = pneg %p54
      %p245 = scmp.lt.s32.totalorder %s20, 1
      %s246 = scalar_select %p245, %s20, 1
      %p247 = scmp.lt.s32.totalorder %s22, 0
      %s248 = scalar_select %p247, %s22, 0
      %s249 = sadd.s32 %s248, %s246
      %s250 = sadd.s32 %s249, 2
      %s251 = smul.addr %s250, 4
      %s252 = scalar_lea.vmem %s1, %s251
      %p253 = pneg %p85
      %p254 = pneg %p82
      %p255 = scmp.lt.s32.totalorder %s20, 1
      %s256 = scalar_select %p255, %s20, 1
      %p257 = scmp.lt.s32.totalorder %s22, 0
      %s258 = scalar_select %p257, %s22, 0
      %s259 = sadd.s32 %s258, %s256
      %s260 = sadd.s32 %s259, 4
      %s261 = smul.addr %s260, 4
      %s262 = scalar_lea.vmem %s2, %s261
      %p263 = pneg %p113
      %p264 = pneg %p110
      %p265 = scmp.lt.s32.totalorder %s20, 1
      %s266 = scalar_select %p265, %s20, 1
      %p267 = scmp.lt.s32.totalorder %s22, 0
      %s268 = scalar_select %p267, %s22, 0
      %s269 = sadd.s32 %s268, %s266
      %s270 = scalar_lea.vmem %s3, %s269
      %p271 = pneg %p141
      %p272 = pneg %p138
      %p273 = pneg %p169
      %p274 = pneg %p166
      %p275 = scmp.lt.s32.totalorder %s20, 1
      %s276 = scalar_select %p275, %s20, 1
      %p277 = scmp.lt.s32.totalorder %s21, 0
      %s278 = scalar_select %p277, %s21, 0
      %s279 = sadd.s32 %s278, %s276
      %s280 = smul.addr %s279, 4
      %s281 = scalar_lea.vmem %s4, %s280
      %p282 = scmp.lt.s32.totalorder %s20, 1
      %s283 = scalar_select %p282, %s20, 1
      %p284 = scmp.lt.s32.totalorder %s21, 0
      %s285 = scalar_select %p284, %s21, 0
      %s286 = sadd.s32 %s285, %s283
      %s287 = smul.addr %s286, 4
      %s288 = scalar_lea.vmem %s0, %s287
      %p289 = scmp.lt.s32.totalorder %s20, 1
      %s290 = scalar_select %p289, %s20, 1
      %p291 = scmp.lt.s32.totalorder %s22, 0
      %s292 = scalar_select %p291, %s22, 0
      %s293 = sadd.s32 %s292, %s290
      %s294 = sadd.s32 %s293, 2
      %s295 = smul.addr %s294, 4
      %s296 = scalar_lea.vmem %s1, %s295
      %p297 = scmp.lt.s32.totalorder %s20, 1
      %s298 = scalar_select %p297, %s20, 1
      %p299 = scmp.lt.s32.totalorder %s22, 0
      %s300 = scalar_select %p299, %s22, 0
      %s301 = sadd.s32 %s300, %s298
      %s302 = sadd.s32 %s301, 4
      %s303 = smul.addr %s302, 4
      %s304 = scalar_lea.vmem %s2, %s303
      %p305 = scmp.lt.s32.totalorder %s20, 1
      %s306 = scalar_select %p305, %s20, 1
      %p307 = scmp.lt.s32.totalorder %s22, 0
      %s308 = scalar_select %p307, %s22, 0
      %s309 = sadd.s32 %s308, %s306
      %s310 = scalar_lea.vmem %s3, %s309
      %p311 = scmp.lt.s32.totalorder %s20, 1
      %s312 = scalar_select %p311, %s20, 1
      %p313 = scmp.lt.s32.totalorder %s21, 0
      %s314 = scalar_select %p313, %s21, 0
      %s315 = sadd.s32 %s314, %s312
      %s316 = smul.addr %s315, 4
      %s317 = scalar_lea.vmem %s4, %s316
      %p319 = scmp.eq.s32.totalorder %s22, 0
      // Predicated region
      $region37: #{encoder_layer.5} parent=35 // pred_check
        %p320 = pneg %p319
      $region38: #{encoder_layer.5} parent=35 // pred_check_branch
        %322 = sbr.rel (%p320) target = $region40
      $region39: #{encoder_layer.5} parent=35 // pred_region
        %vm323 = vcmask 31744
        %324 = vst.msk [vmem:[#allocation2] sm:$0xff] %vm323, -inf
        %325 = vst.msk [vmem:[#allocation3] sm:$0xff] %vm323, 0.0
        %vm326 = vcmask 261120
        %327 = vst.msk [vmem:[#allocation4] sm:$0xff] %vm326, 0.0
      $region40: #{encoder_layer.5} parent=35 // pred_fallthru
        _
      %v328 = vld [vmem:[%s288] sm:$0xf]
      %v329 = vld [vmem:[%s296] sm:$0xf]
      %v330 = vld [vmem:[%s304] sm:$0xf]
      %v331 = vld [vmem:[%s310] sm:$0x1]
      %vm332 = vcmp.gt.f32.partialorder %v331, 0.0
      %vm333 = vcmask 64512
      %v335 = vsel %vm333, %v328, 0
      %v338 = vsel %vm333, %v329, 0
      %340 = vmatprep.subr.bf16.mxu0 0
      %341 = vmatpush1.bf16.xpose.msra.mxu0 0
      %342 = vmatprep.subr.bf16.mxu0 0
      %343 = vmatpush1.bf16.xpose.msra.mxu0 0
      %344 = vmatprep.subr.bf16.mxu0 0
      %345 = vmatpush1.bf16.xpose.msra.mxu0 0
      %346 = vmatprep.subr.bf16.mxu0 0
      %347 = vmatpush1.bf16.xpose.msra.mxu0 0
      %348 = vmatprep.subr.bf16.mxu0 0
      %349 = vmatpush1.bf16.xpose.msra.mxu0 0
      %350 = vmatprep.subr.bf16.mxu0 0
      %351 = vmatpush1.bf16.xpose.msra.mxu0 0
      %352 = vmatprep.subr.bf16.mxu0 0
      %353 = vmatpush1.bf16.xpose.msra.mxu0 0
      %354 = vmatprep.subr.bf16.mxu0 0
      %355 = vmatpush1.bf16.xpose.msra.mxu0 %v338
      %356 = vmatprep.subr.bf16.mxu0 0
      %357 = vmatpush2.bf16.xpose.msra.mxu0 0
      %358 = vmatprep.subr.bf16.mxu0 0
      %359 = vmatpush2.bf16.xpose.msra.mxu0 0
      %360 = vmatprep.subr.bf16.mxu0 0
      %361 = vmatpush2.bf16.xpose.msra.mxu0 0
      %362 = vmatprep.subr.bf16.mxu0 0
      %363 = vmatpush2.bf16.xpose.msra.mxu0 0
      %364 = vmatprep.subr.bf16.mxu0 0
      %365 = vmatpush2.bf16.xpose.msra.mxu0 0
      %366 = vmatprep.subr.bf16.mxu0 0
      %367 = vmatpush2.bf16.xpose.msra.mxu0 0
      %368 = vmatprep.subr.bf16.mxu0 0
      %369 = vmatpush2.bf16.xpose.msra.mxu0 0
      %370 = vmatprep.subr.bf16.mxu0 0
      %371 = vmatpush2.bf16.xpose.msra.mxu0 0
      %372 = vmatprep.mubr.bf16.mxu0 0
      %373 = vmatmul.mubr.bf16.gmra.mxu0 %v335
      %v374 = vpop.f32.mrf.mxu0
      %v375 = vadd.f32 0.0, %v374
      %v376 = vpop.f32.mrf.mxu0
      %v377 = vpop.f32.mrf.mxu0
      %v378 = vpop.f32.mrf.mxu0
      %379 = vdwg.mxu0
      %v380 = vsel %vm332, 1, 0
      %v381 = vlaneseq
      %v382 = vshrl.u32 %v381, 7
      %v383 = vsub.s32 0, %v382
      %v384 = vrot.slane %v380, %v383
      %vm385 = vcmp.eq.s32.totalorder %v384, 1
      %v386 = vsel %vm385, %v375, -1e+09
      %v387 = vld [vmem:[#allocation2] sm:$0xff]
      %v388 = vld [vmem:[#allocation3] sm:$0xff]
      %v389 = vsel %vm333, %v386, -inf
      %390 = vmax.xlane.f32.xlu0 %v389
      %v391 = vpop.xlane.xlu0 %390
      %v392 = vmax.f32 %v387, %v391
      %v393 = vsub.f32 %v387, %v392
      %v394 = vmul.f32 %v393, 1.442695
      %v395 = vpow.pop %v394
      %397 = vset.pattern.permute.xlu0 0
      %398 = vperm.xlu0 %397, %v392
      %v399 = vpop.permute.xlu0 %398
      %v401 = vsub.f32 %v386, %v399
      %v402 = vmul.f32 %v401, 1.442695
      %v403 = vpow.pop %v402
      %v404 = vmul.f32 %v395, %v388
      %v405 = vsel %vm333, %v403, 0.0
      %406 = vadd.xlane.f32.xlu0 %v405
      %v407 = vpop.xlane.xlu0 %406
      %v408 = vadd.f32 %v404, %v407
      %vm409 = vcmask 7168
      %410 = vst.msk [vmem:[#allocation3] sm:$0xff] %vm409, %v408
      %v411 = vpack.c.bf16 %v403, %v403
      %v413 = vsel %vm333, %v411, 0
      %vm415 = vcmask 1043456
      %v417 = vsel %vm415, %v330, 0
      %419 = vmatprep.subr.bf16.mxu0 0
      %420 = vmatpush1.bf16.msra.mxu0 0
      %421 = vmatprep.subr.bf16.mxu0 0
      %422 = vmatpush1.bf16.msra.mxu0 0
      %423 = vmatprep.subr.bf16.mxu0 0
      %424 = vmatpush1.bf16.msra.mxu0 0
      %425 = vmatprep.subr.bf16.mxu0 0
      %426 = vmatpush1.bf16.msra.mxu0 0
      %427 = vmatprep.subr.bf16.mxu0 0
      %428 = vmatpush1.bf16.msra.mxu0 0
      %429 = vmatprep.subr.bf16.mxu0 0
      %430 = vmatpush1.bf16.msra.mxu0 0
      %431 = vmatprep.subr.bf16.mxu0 0
      %432 = vmatpush1.bf16.msra.mxu0 0
      %433 = vmatprep.subr.bf16.mxu0 0
      %434 = vmatpush1.bf16.msra.mxu0 %v417
      %435 = vmatprep.subr.bf16.mxu0 0
      %436 = vmatpush2.bf16.msra.mxu0 0
      %437 = vmatprep.subr.bf16.mxu0 0
      %438 = vmatpush2.bf16.msra.mxu0 0
      %439 = vmatprep.subr.bf16.mxu0 0
      %440 = vmatpush2.bf16.msra.mxu0 0
      %441 = vmatprep.subr.bf16.mxu0 0
      %442 = vmatpush2.bf16.msra.mxu0 0
      %443 = vmatprep.subr.bf16.mxu0 0
      %444 = vmatpush2.bf16.msra.mxu0 0
      %445 = vmatprep.subr.bf16.mxu0 0
      %446 = vmatpush2.bf16.msra.mxu0 0
      %447 = vmatprep.subr.bf16.mxu0 0
      %448 = vmatpush2.bf16.msra.mxu0 0
      %449 = vmatprep.subr.bf16.mxu0 0
      %450 = vmatpush2.bf16.msra.mxu0 0
      %451 = vmatprep.mubr.bf16.mxu0 0
      %452 = vmatmul.mubr.bf16.gmra.mxu0 %v413
      %v453 = vpop.f32.mrf.mxu0
      %v454 = vadd.f32 0.0, %v453
      %v455 = vpop.f32.mrf.mxu0
      %v456 = vpop.f32.mrf.mxu0
      %v457 = vpop.f32.mrf.mxu0
      %458 = vdwg.mxu0
      %v459 = vld [vmem:[#allocation4] sm:$0xff]
      %461 = vset.pattern.permute.xlu0 0
      %462 = vperm.xlu0 %461, %v395
      %v463 = vpop.permute.xlu0 %462
      %v465 = vmul.f32 %v463, %v459
      %v466 = vadd.f32 %v465, %v454
      %467 = vst.msk [vmem:[#allocation4] sm:$0xff] %vm333, %v466
      %468 = vst.msk [vmem:[#allocation2] sm:$0xff] %vm409, %v392
      %v470 = vunpack.c.l.b16 %v328
      %v471 = vpack.c.b16 %v470, %v470
      %472 = vrot.lane.b32.xlu0 %v471, 120
      %v473 = vpop.permute.xlu0 %472
      %v475 = vunpack.c.l.b16 %v329
      %v476 = vpack.c.b16 %v475, %v475
      %477 = vrot.lane.b32.xlu0 %v476, 120
      %v478 = vpop.permute.xlu0 %477
      %v480 = vsel %vm333, %v473, 0
      %v483 = vsel %vm333, %v478, 0
      %485 = vmatprep.subr.bf16.mxu0 0
      %486 = vmatpush1.bf16.xpose.msra.mxu0 0
      %487 = vmatprep.subr.bf16.mxu0 0
      %488 = vmatpush1.bf16.xpose.msra.mxu0 0
      %489 = vmatprep.subr.bf16.mxu0 0
      %490 = vmatpush1.bf16.xpose.msra.mxu0 0
      %491 = vmatprep.subr.bf16.mxu0 0
      %492 = vmatpush1.bf16.xpose.msra.mxu0 0
      %493 = vmatprep.subr.bf16.mxu0 0
      %494 = vmatpush1.bf16.xpose.msra.mxu0 0
      %495 = vmatprep.subr.bf16.mxu0 0
      %496 = vmatpush1.bf16.xpose.msra.mxu0 0
      %497 = vmatprep.subr.bf16.mxu0 0
      %498 = vmatpush1.bf16.xpose.msra.mxu0 0
      %499 = vmatprep.subr.bf16.mxu0 0
      %500 = vmatpush1.bf16.xpose.msra.mxu0 %v483
      %501 = vmatprep.subr.bf16.mxu0 0
      %502 = vmatpush2.bf16.xpose.msra.mxu0 0
      %503 = vmatprep.subr.bf16.mxu0 0
      %504 = vmatpush2.bf16.xpose.msra.mxu0 0
      %505 = vmatprep.subr.bf16.mxu0 0
      %506 = vmatpush2.bf16.xpose.msra.mxu0 0
      %507 = vmatprep.subr.bf16.mxu0 0
      %508 = vmatpush2.bf16.xpose.msra.mxu0 0
      %509 = vmatprep.subr.bf16.mxu0 0
      %510 = vmatpush2.bf16.xpose.msra.mxu0 0
      %511 = vmatprep.subr.bf16.mxu0 0
      %512 = vmatpush2.bf16.xpose.msra.mxu0 0
      %513 = vmatprep.subr.bf16.mxu0 0
      %514 = vmatpush2.bf16.xpose.msra.mxu0 0
      %515 = vmatprep.subr.bf16.mxu0 0
      %516 = vmatpush2.bf16.xpose.msra.mxu0 0
      %517 = vmatprep.mubr.bf16.mxu0 0
      %518 = vmatmul.mubr.bf16.gmra.mxu0 %v480
      %v519 = vpop.f32.mrf.mxu0
      %v520 = vadd.f32 0.0, %v519
      %v521 = vpop.f32.mrf.mxu0
      %v522 = vpop.f32.mrf.mxu0
      %v523 = vpop.f32.mrf.mxu0
      %524 = vdwg.mxu0
      %v525 = vsel %vm385, %v520, -1e+09
      %v526 = vld [vmem:[#allocation2] sm:$0xff]
      %v527 = vld [vmem:[#allocation3] sm:$0xff]
      %v528 = vsel %vm333, %v525, -inf
      %529 = vmax.xlane.f32.xlu0 %v528
      %v530 = vpop.xlane.xlu0 %529
      %v531 = vmax.f32 %v526, %v530
      %v532 = vsub.f32 %v526, %v531
      %v533 = vmul.f32 %v532, 1.442695
      %v534 = vpow.pop %v533
      %536 = vset.pattern.permute.xlu0 1
      %537 = vperm.xlu0 %536, %v531
      %v538 = vpop.permute.xlu0 %537
      %v540 = vsub.f32 %v525, %v538
      %v541 = vmul.f32 %v540, 1.442695
      %v542 = vpow.pop %v541
      %v543 = vmul.f32 %v534, %v527
      %v544 = vsel %vm333, %v542, 0.0
      %545 = vadd.xlane.f32.xlu0 %v544
      %v546 = vpop.xlane.xlu0 %545
      %v547 = vadd.f32 %v543, %v546
      %vm548 = vcmask 15368
      %549 = vst.msk [vmem:[#allocation3] sm:$0xff] %vm548, %v547
      %v550 = vpack.c.bf16 %v542, %v542
      %v552 = vunpack.c.l.b16 %v330
      %v553 = vpack.c.b16 %v552, %v552
      %554 = vrot.lane.b32.xlu0 %v553, 120
      %v555 = vpop.permute.xlu0 %554
      %v557 = vsel %vm333, %v550, 0
      %v560 = vsel %vm415, %v555, 0
      %562 = vmatprep.subr.bf16.mxu0 0
      %563 = vmatpush1.bf16.msra.mxu0 0
      %564 = vmatprep.subr.bf16.mxu0 0
      %565 = vmatpush1.bf16.msra.mxu0 0
      %566 = vmatprep.subr.bf16.mxu0 0
      %567 = vmatpush1.bf16.msra.mxu0 0
      %568 = vmatprep.subr.bf16.mxu0 0
      %569 = vmatpush1.bf16.msra.mxu0 0
      %570 = vmatprep.subr.bf16.mxu0 0
      %571 = vmatpush1.bf16.msra.mxu0 0
      %572 = vmatprep.subr.bf16.mxu0 0
      %573 = vmatpush1.bf16.msra.mxu0 0
      %574 = vmatprep.subr.bf16.mxu0 0
      %575 = vmatpush1.bf16.msra.mxu0 0
      %576 = vmatprep.subr.bf16.mxu0 0
      %577 = vmatpush1.bf16.msra.mxu0 %v560
      %578 = vmatprep.subr.bf16.mxu0 0
      %579 = vmatpush2.bf16.msra.mxu0 0
      %580 = vmatprep.subr.bf16.mxu0 0
      %581 = vmatpush2.bf16.msra.mxu0 0
      %582 = vmatprep.subr.bf16.mxu0 0
      %583 = vmatpush2.bf16.msra.mxu0 0
      %584 = vmatprep.subr.bf16.mxu0 0
      %585 = vmatpush2.bf16.msra.mxu0 0
      %586 = vmatprep.subr.bf16.mxu0 0
      %587 = vmatpush2.bf16.msra.mxu0 0
      %588 = vmatprep.subr.bf16.mxu0 0
      %589 = vmatpush2.bf16.msra.mxu0 0
      %590 = vmatprep.subr.bf16.mxu0 0
      %591 = vmatpush2.bf16.msra.mxu0 0
      %592 = vmatprep.subr.bf16.mxu0 0
      %593 = vmatpush2.bf16.msra.mxu0 0
      %594 = vmatprep.mubr.bf16.mxu0 0
      %595 = vmatmul.mubr.bf16.gmra.mxu0 %v557
      %v596 = vpop.f32.mrf.mxu0
      %v597 = vadd.f32 0.0, %v596
      %v598 = vpop.f32.mrf.mxu0
      %v599 = vpop.f32.mrf.mxu0
      %v600 = vpop.f32.mrf.mxu0
      %601 = vdwg.mxu0
      %v602 = vld [vmem:[#allocation4] sm:$0xff]
      %604 = vset.pattern.permute.xlu0 1
      %605 = vperm.xlu0 %604, %v534
      %v606 = vpop.permute.xlu0 %605
      %v608 = vmul.f32 %v606, %v602
      %610 = vrot.lane.b32.xlu0 %v597, 8
      %v611 = vpop.permute.xlu0 %610
      %v613 = vadd.f32 %v608, %v611
      %vm614 = vcmask 130112
      %615 = vst.msk [vmem:[#allocation4] sm:$0xff] %vm614, %v613
      %616 = vst.msk [vmem:[#allocation2] sm:$0xff] %vm548, %v531
      %617 = vrot.lane.b32.xlu0 %v471, 112
      %v618 = vpop.permute.xlu0 %617
      %619 = vrot.lane.b32.xlu0 %v476, 112
      %v620 = vpop.permute.xlu0 %619
      %v622 = vsel %vm333, %v618, 0
      %v625 = vsel %vm333, %v620, 0
      %627 = vmatprep.subr.bf16.mxu0 0
      %628 = vmatpush1.bf16.xpose.msra.mxu0 0
      %629 = vmatprep.subr.bf16.mxu0 0
      %630 = vmatpush1.bf16.xpose.msra.mxu0 0
      %631 = vmatprep.subr.bf16.mxu0 0
      %632 = vmatpush1.bf16.xpose.msra.mxu0 0
      %633 = vmatprep.subr.bf16.mxu0 0
      %634 = vmatpush1.bf16.xpose.msra.mxu0 0
      %635 = vmatprep.subr.bf16.mxu0 0
      %636 = vmatpush1.bf16.xpose.msra.mxu0 0
      %637 = vmatprep.subr.bf16.mxu0 0
      %638 = vmatpush1.bf16.xpose.msra.mxu0 0
      %639 = vmatprep.subr.bf16.mxu0 0
      %640 = vmatpush1.bf16.xpose.msra.mxu0 0
      %641 = vmatprep.subr.bf16.mxu0 0
      %642 = vmatpush1.bf16.xpose.msra.mxu0 %v625
      %643 = vmatprep.subr.bf16.mxu0 0
      %644 = vmatpush2.bf16.xpose.msra.mxu0 0
      %645 = vmatprep.subr.bf16.mxu0 0
      %646 = vmatpush2.bf16.xpose.msra.mxu0 0
      %647 = vmatprep.subr.bf16.mxu0 0
      %648 = vmatpush2.bf16.xpose.msra.mxu0 0
      %649 = vmatprep.subr.bf16.mxu0 0
      %650 = vmatpush2.bf16.xpose.msra.mxu0 0
      %651 = vmatprep.subr.bf16.mxu0 0
      %652 = vmatpush2.bf16.xpose.msra.mxu0 0
      %653 = vmatprep.subr.bf16.mxu0 0
      %654 = vmatpush2.bf16.xpose.msra.mxu0 0
      %655 = vmatprep.subr.bf16.mxu0 0
      %656 = vmatpush2.bf16.xpose.msra.mxu0 0
      %657 = vmatprep.subr.bf16.mxu0 0
      %658 = vmatpush2.bf16.xpose.msra.mxu0 0
      %659 = vmatprep.mubr.bf16.mxu0 0
      %660 = vmatmul.mubr.bf16.gmra.mxu0 %v622
      %v661 = vpop.f32.mrf.mxu0
      %v662 = vadd.f32 0.0, %v661
      %v663 = vpop.f32.mrf.mxu0
      %v664 = vpop.f32.mrf.mxu0
      %v665 = vpop.f32.mrf.mxu0
      %666 = vdwg.mxu0
      %v667 = vsel %vm385, %v662, -1e+09
      %v668 = vld [vmem:[#allocation2] sm:$0xff]
      %v669 = vld [vmem:[#allocation3] sm:$0xff]
      %v670 = vsel %vm333, %v667, -inf
      %671 = vmax.xlane.f32.xlu0 %v670
      %v672 = vpop.xlane.xlu0 %671
      %v673 = vmax.f32 %v668, %v672
      %v674 = vsub.f32 %v668, %v673
      %v675 = vmul.f32 %v674, 1.442695
      %v676 = vpow.pop %v675
      %678 = vset.pattern.permute.xlu0 2
      %679 = vperm.xlu0 %678, %v673
      %v680 = vpop.permute.xlu0 %679
      %v682 = vsub.f32 %v667, %v680
      %v683 = vmul.f32 %v682, 1.442695
      %v684 = vpow.pop %v683
      %v685 = vmul.f32 %v676, %v669
      %v686 = vsel %vm333, %v684, 0.0
      %687 = vadd.xlane.f32.xlu0 %v686
      %v688 = vpop.xlane.xlu0 %687
      %v689 = vadd.f32 %v685, %v688
      %vm690 = vcmask 23568
      %691 = vst.msk [vmem:[#allocation3] sm:$0xff] %vm690, %v689
      %v692 = vpack.c.bf16 %v684, %v684
      %693 = vrot.lane.b32.xlu0 %v553, 112
      %v694 = vpop.permute.xlu0 %693
      %v696 = vsel %vm333, %v692, 0
      %v699 = vsel %vm415, %v694, 0
      %701 = vmatprep.subr.bf16.mxu0 0
      %702 = vmatpush1.bf16.msra.mxu0 0
      %703 = vmatprep.subr.bf16.mxu0 0
      %704 = vmatpush1.bf16.msra.mxu0 0
      %705 = vmatprep.subr.bf16.mxu0 0
      %706 = vmatpush1.bf16.msra.mxu0 0
      %707 = vmatprep.subr.bf16.mxu0 0
      %708 = vmatpush1.bf16.msra.mxu0 0
      %709 = vmatprep.subr.bf16.mxu0 0
      %710 = vmatpush1.bf16.msra.mxu0 0
      %711 = vmatprep.subr.bf16.mxu0 0
      %712 = vmatpush1.bf16.msra.mxu0 0
      %713 = vmatprep.subr.bf16.mxu0 0
      %714 = vmatpush1.bf16.msra.mxu0 0
      %715 = vmatprep.subr.bf16.mxu0 0
      %716 = vmatpush1.bf16.msra.mxu0 %v699
      %717 = vmatprep.subr.bf16.mxu0 0
      %718 = vmatpush2.bf16.msra.mxu0 0
      %719 = vmatprep.subr.bf16.mxu0 0
      %720 = vmatpush2.bf16.msra.mxu0 0
      %721 = vmatprep.subr.bf16.mxu0 0
      %722 = vmatpush2.bf16.msra.mxu0 0
      %723 = vmatprep.subr.bf16.mxu0 0
      %724 = vmatpush2.bf16.msra.mxu0 0
      %725 = vmatprep.subr.bf16.mxu0 0
      %726 = vmatpush2.bf16.msra.mxu0 0
      %727 = vmatprep.subr.bf16.mxu0 0
      %728 = vmatpush2.bf16.msra.mxu0 0
      %729 = vmatprep.subr.bf16.mxu0 0
      %730 = vmatpush2.bf16.msra.mxu0 0
      %731 = vmatprep.subr.bf16.mxu0 0
      %732 = vmatpush2.bf16.msra.mxu0 0
      %733 = vmatprep.mubr.bf16.mxu0 0
      %734 = vmatmul.mubr.bf16.gmra.mxu0 %v696
      %v735 = vpop.f32.mrf.mxu0
      %v736 = vadd.f32 0.0, %v735
      %v737 = vpop.f32.mrf.mxu0
      %v738 = vpop.f32.mrf.mxu0
      %v739 = vpop.f32.mrf.mxu0
      %740 = vdwg.mxu0
      %v741 = vld [vmem:[#allocation4] sm:$0xff]
      %743 = vset.pattern.permute.xlu0 2
      %744 = vperm.xlu0 %743, %v676
      %v745 = vpop.permute.xlu0 %744
      %v747 = vmul.f32 %v745, %v741
      %749 = vrot.lane.b32.xlu0 %v736, 16
      %v750 = vpop.permute.xlu0 %749
      %v752 = vadd.f32 %v747, %v750
      %vm753 = vcmask 195712
      %754 = vst.msk [vmem:[#allocation4] sm:$0xff] %vm753, %v752
      %755 = vst.msk [vmem:[#allocation2] sm:$0xff] %vm690, %v673
      %756 = vrot.lane.b32.xlu0 %v471, 104
      %v757 = vpop.permute.xlu0 %756
      %758 = vrot.lane.b32.xlu0 %v476, 104
      %v759 = vpop.permute.xlu0 %758
      %v761 = vsel %vm333, %v757, 0
      %v764 = vsel %vm333, %v759, 0
      %766 = vmatprep.subr.bf16.mxu0 0
      %767 = vmatpush1.bf16.xpose.msra.mxu0 0
      %768 = vmatprep.subr.bf16.mxu0 0
      %769 = vmatpush1.bf16.xpose.msra.mxu0 0
      %770 = vmatprep.subr.bf16.mxu0 0
      %771 = vmatpush1.bf16.xpose.msra.mxu0 0
      %772 = vmatprep.subr.bf16.mxu0 0
      %773 = vmatpush1.bf16.xpose.msra.mxu0 0
      %774 = vmatprep.subr.bf16.mxu0 0
      %775 = vmatpush1.bf16.xpose.msra.mxu0 0
      %776 = vmatprep.subr.bf16.mxu0 0
      %777 = vmatpush1.bf16.xpose.msra.mxu0 0
      %778 = vmatprep.subr.bf16.mxu0 0
      %779 = vmatpush1.bf16.xpose.msra.mxu0 0
      %780 = vmatprep.subr.bf16.mxu0 0
      %781 = vmatpush1.bf16.xpose.msra.mxu0 %v764
      %782 = vmatprep.subr.bf16.mxu0 0
      %783 = vmatpush2.bf16.xpose.msra.mxu0 0
      %784 = vmatprep.subr.bf16.mxu0 0
      %785 = vmatpush2.bf16.xpose.msra.mxu0 0
      %786 = vmatprep.subr.bf16.mxu0 0
      %787 = vmatpush2.bf16.xpose.msra.mxu0 0
      %788 = vmatprep.subr.bf16.mxu0 0
      %789 = vmatpush2.bf16.xpose.msra.mxu0 0
      %790 = vmatprep.subr.bf16.mxu0 0
      %791 = vmatpush2.bf16.xpose.msra.mxu0 0
      %792 = vmatprep.subr.bf16.mxu0 0
      %793 = vmatpush2.bf16.xpose.msra.mxu0 0
      %794 = vmatprep.subr.bf16.mxu0 0
      %795 = vmatpush2.bf16.xpose.msra.mxu0 0
      %796 = vmatprep.subr.bf16.mxu0 0
      %797 = vmatpush2.bf16.xpose.msra.mxu0 0
      %798 = vmatprep.mubr.bf16.mxu0 0
      %799 = vmatmul.mubr.bf16.gmra.mxu0 %v761
      %v800 = vpop.f32.mrf.mxu0
      %v801 = vadd.f32 0.0, %v800
      %v802 = vpop.f32.mrf.mxu0
      %v803 = vpop.f32.mrf.mxu0
      %v804 = vpop.f32.mrf.mxu0
      %805 = vdwg.mxu0
      %v806 = vsel %vm385, %v801, -1e+09
      %v807 = vld [vmem:[#allocation2] sm:$0xff]
      %v808 = vld [vmem:[#allocation3] sm:$0xff]
      %v809 = vsel %vm333, %v806, -inf
      %810 = vmax.xlane.f32.xlu0 %v809
      %v811 = vpop.xlane.xlu0 %810
      %v812 = vmax.f32 %v807, %v811
      %v813 = vsub.f32 %v807, %v812
      %v814 = vmul.f32 %v813, 1.442695
      %v815 = vpow.pop %v814
      %817 = vset.pattern.permute.xlu0 3
      %818 = vperm.xlu0 %817, %v812
      %v819 = vpop.permute.xlu0 %818
      %v821 = vsub.f32 %v806, %v819
      %v822 = vmul.f32 %v821, 1.442695
      %v823 = vpow.pop %v822
      %v824 = vmul.f32 %v815, %v808
      %v825 = vsel %vm333, %v823, 0.0
      %826 = vadd.xlane.f32.xlu0 %v825
      %v827 = vpop.xlane.xlu0 %826
      %v828 = vadd.f32 %v824, %v827
      %vm829 = vcmask 31768
      %830 = vst.msk [vmem:[#allocation3] sm:$0xff] %vm829, %v828
      %v831 = vpack.c.bf16 %v823, %v823
      %832 = vrot.lane.b32.xlu0 %v553, 104
      %v833 = vpop.permute.xlu0 %832
      %v835 = vsel %vm333, %v831, 0
      %v838 = vsel %vm415, %v833, 0
      %840 = vmatprep.subr.bf16.mxu0 0
      %841 = vmatpush1.bf16.msra.mxu0 0
      %842 = vmatprep.subr.bf16.mxu0 0
      %843 = vmatpush1.bf16.msra.mxu0 0
      %844 = vmatprep.subr.bf16.mxu0 0
      %845 = vmatpush1.bf16.msra.mxu0 0
      %846 = vmatprep.subr.bf16.mxu0 0
      %847 = vmatpush1.bf16.msra.mxu0 0
      %848 = vmatprep.subr.bf16.mxu0 0
      %849 = vmatpush1.bf16.msra.mxu0 0
      %850 = vmatprep.subr.bf16.mxu0 0
      %851 = vmatpush1.bf16.msra.mxu0 0
      %852 = vmatprep.subr.bf16.mxu0 0
      %853 = vmatpush1.bf16.msra.mxu0 0
      %854 = vmatprep.subr.bf16.mxu0 0
      %855 = vmatpush1.bf16.msra.mxu0 %v838
      %856 = vmatprep.subr.bf16.mxu0 0
      %857 = vmatpush2.bf16.msra.mxu0 0
      %858 = vmatprep.subr.bf16.mxu0 0
      %859 = vmatpush2.bf16.msra.mxu0 0
      %860 = vmatprep.subr.bf16.mxu0 0
      %861 = vmatpush2.bf16.msra.mxu0 0
      %862 = vmatprep.subr.bf16.mxu0 0
      %863 = vmatpush2.bf16.msra.mxu0 0
      %864 = vmatprep.subr.bf16.mxu0 0
      %865 = vmatpush2.bf16.msra.mxu0 0
      %866 = vmatprep.subr.bf16.mxu0 0
      %867 = vmatpush2.bf16.msra.mxu0 0
      %868 = vmatprep.subr.bf16.mxu0 0
      %869 = vmatpush2.bf16.msra.mxu0 0
      %870 = vmatprep.subr.bf16.mxu0 0
      %871 = vmatpush2.bf16.msra.mxu0 0
      %872 = vmatprep.mubr.bf16.mxu0 0
      %873 = vmatmul.mubr.bf16.gmra.mxu0 %v835
      %v874 = vpop.f32.mrf.mxu0
      %v875 = vadd.f32 0.0, %v874
      %v876 = vpop.f32.mrf.mxu0
      %v877 = vpop.f32.mrf.mxu0
      %v878 = vpop.f32.mrf.mxu0
      %879 = vdwg.mxu0
      %v880 = vld [vmem:[#allocation4] sm:$0xff]
      %882 = vset.pattern.permute.xlu0 3
      %883 = vperm.xlu0 %882, %v815
      %v884 = vpop.permute.xlu0 %883
      %v886 = vmul.f32 %v884, %v880
      %888 = vrot.lane.b32.xlu0 %v875, 24
      %v889 = vpop.permute.xlu0 %888
      %v891 = vadd.f32 %v886, %v889
      %vm892 = vcmask 261312
      %893 = vst.msk [vmem:[#allocation4] sm:$0xff] %vm892, %v891
      %894 = vst.msk [vmem:[#allocation2] sm:$0xff] %vm829, %v812
      // Predicated region
      $region41: #{encoder_layer.5} parent=35 // pred_check
        %p895 = pneg %p319
      $region42: #{encoder_layer.5} parent=35 // pred_check_branch
        %897 = sbr.rel (%p895) target = $region44
      $region43: #{encoder_layer.5} parent=35 // pred_region
        %v898 = vld [vmem:[#allocation3] sm:$0xff]
        %v899 = vrcp.pop %v898
        %v900 = vld [vmem:[#allocation4] sm:$0xff]
        %902 = vset.pattern.permute.xlu0 0
        %903 = vperm.xlu0 %902, %v899
        %v904 = vpop.permute.xlu0 %903
        %v906 = vmul.f32 %v900, %v904
        %907 = vst.msk [vmem:[#allocation4] sm:$0xff] %vm333, %v906
        %v908 = vld [vmem:[#allocation3] sm:$0xff]
        %v909 = vrcp.pop %v908
        %v910 = vld [vmem:[#allocation4] sm:$0xff]
        %912 = vset.pattern.permute.xlu0 1
        %913 = vperm.xlu0 %912, %v909
        %v914 = vpop.permute.xlu0 %913
        %v916 = vmul.f32 %v910, %v914
        %917 = vst.msk [vmem:[#allocation4] sm:$0xff] %vm614, %v916
        %v918 = vld [vmem:[#allocation3] sm:$0xff]
        %v919 = vrcp.pop %v918
        %v920 = vld [vmem:[#allocation4] sm:$0xff]
        %922 = vset.pattern.permute.xlu0 2
        %923 = vperm.xlu0 %922, %v919
        %v924 = vpop.permute.xlu0 %923
        %v926 = vmul.f32 %v920, %v924
        %927 = vst.msk [vmem:[#allocation4] sm:$0xff] %vm753, %v926
        %v928 = vld [vmem:[#allocation3] sm:$0xff]
        %v929 = vrcp.pop %v928
        %v930 = vld [vmem:[#allocation4] sm:$0xff]
        %932 = vset.pattern.permute.xlu0 3
        %933 = vperm.xlu0 %932, %v929
        %v934 = vpop.permute.xlu0 %933
        %v936 = vmul.f32 %v930, %v934
        %937 = vst.msk [vmem:[#allocation4] sm:$0xff] %vm892, %v936
        %v938 = vld [vmem:[#allocation4] sm:$0xff]
        %v939 = vpack.c.bf16 %v938, %v938
        %vm940 = vcmask 257024
        %941 = vst.msk [vmem:[%s317] sm:$0xf] %vm940, %v939
      $region44: #{encoder_layer.5} parent=35 // pred_fallthru
        _
      %p942 = scmp.lt.s32.totalorder %s20, 1
      %s943 = scalar_select %p942, %s20, 1
      %p944 = scmp.lt.s32.totalorder %s21, 0
      %s945 = scalar_select %p944, %s21, 0
      %s946 = sadd.s32 %s945, %s943
      %s947 = smul.addr %s946, 4
      %s948 = scalar_lea.vmem %s4, %s947
      // Predicated region
      $region45: #{encoder_layer.5} parent=35 // pred_check
        %p949 = pneg %p166
      $region46: #{encoder_layer.5} parent=35 // pred_check_branch
        %951 = sbr.rel (%p949) target = $region48
      $region47: #{encoder_layer.5} parent=35 // pred_region
        _
      $region48: #{encoder_layer.5} parent=35 // pred_fallthru
        _
    $region36: #{encoder_layer.5} parent=5 // pred_fallthru
      _
    %p952 = scmp.le.s32.totalorder 2, %s10
    // Predicated region
    $region49: #{encoder_layer.5} parent=5 // pred_check
      %p953 = pneg %p952
    $region50: #{encoder_layer.5} parent=5 // pred_check_branch
      %955 = sbr.rel (%p953) target = $region52
    $region51: #{encoder_layer.5} parent=5 // pred_region
      %s956 = ssub.s32 %s10, 2
      // Predicated region
      $region53: #{encoder_layer.5} parent=51 // pred_check
        %p957 = pneg %p172
      $region54: #{encoder_layer.5} parent=51 // pred_check_branch
        %959 = sbr.rel (%p957) target = $region56
      $region55: #{encoder_layer.5} parent=51 // pred_region
        %p960 = scmp.lt.s32.totalorder %s23, 1
        %s961 = scalar_select %p960, %s23, 1
        %p962 = scmp.lt.s32.totalorder %s24, 0
        %s963 = scalar_select %p962, %s24, 0
        %s964 = sadd.s32 %s963, %s961
        %s965 = smul.addr %s964, 4
        %s966 = scalar_lea.vmem %s4, %s965
      $region56: #{encoder_layer.5} parent=51 // pred_fallthru
        _
    $region52: #{encoder_layer.5} parent=5 // pred_fallthru
      _
  $region6: #{encoder_layer.5} parent=0 // loop_footer
    %s14 = sadd.s32 1, %s10
  $region7: #{encoder_layer.5} parent=0 // loop_footer_branch
    %9 = sbr.rel target = $region3
  $region8: #{encoder_layer.5} parent=0 // loop_exit
    _

// kernel: encoder_layer.7
$region0: #{encoder_layer.7}
  #allocation0 [shape = 'u32[]', space=smem, size = 0x4, offset = 0x4, fixed_abs, tag = 'smem constant byte address 0x4 - core index']
  #allocation1 [shape = 'u32[144,128]{1,0:T(1,128)}', space=vmem, size = 0x12000, scoped, tag = 'internal scratch']
  #allocation2 [shape = 'f32[16,32]{1,0:T(8,128)}', space=vmem, size = 0x2000, scoped, tag = 'scratch operand']
  %s0 = inlined_call_operand.vmem [shape: f32[16,32], index: 0, kind: input, shape index: {}]
  %s1 = inlined_call_operand.vmem [shape: bf16[32,64], index: 1, kind: input, shape index: {}]
  %s2 = inlined_call_operand.vmem [shape: f32[1,64], index: 2, kind: input, shape index: {}]
  %s3 = inlined_call_operand.vmem [shape: bf16[64,32], index: 3, kind: input, shape index: {}]
  %s4 = inlined_call_operand.vmem [shape: f32[1,32], index: 4, kind: input, shape index: {}]
  %s5 = inlined_call_operand.hbm [shape: f32[16,32], index: 5, kind: output, shape index: {}]
  %s6 = sld [smem:[#allocation0]]
  $region38: #{encoder_layer.7} parent=0
    _
  %s8 = ssub.s32 1, %s6
  %s9 = scalar_select 0, %s8, %s6
  $region1: #{encoder_layer.7} parent=0
    #allocation3 [shape = 'u8[8192]{0}', space=vmem, size = 0x2000, scoped, tag = 'output window, operand 0, single buffered']
    #allocation4 [shape = 's32[1]{0}', space=sflag, size = 0x4, scoped, tag = 'scoped memory for encoder_layer.7']
    %10 = vsyncpa [#allocation4], 0
    // Predicated region
    $region2: #{encoder_layer.7} parent=1 // pred_check
      _
    $region3: #{encoder_layer.7} parent=1 // pred_check_branch
      %12 = sbr.rel (0) target = $region5
    $region4: #{encoder_layer.7} parent=1 // pred_region
      _
    $region5: #{encoder_layer.7} parent=1 // pred_fallthru
      _
    // Predicated region
    $region6: #{encoder_layer.7} parent=1 // pred_check
      _
    $region7: #{encoder_layer.7} parent=1 // pred_check_branch
      %14 = sbr.rel (0) target = $region9
    $region8: #{encoder_layer.7} parent=1 // pred_region
      _
    $region9: #{encoder_layer.7} parent=1 // pred_fallthru
      _
    // Predicated region
    $region10: #{encoder_layer.7} parent=1 // pred_check
      _
    $region11: #{encoder_layer.7} parent=1 // pred_check_branch
      %16 = sbr.rel (0) target = $region13
    $region12: #{encoder_layer.7} parent=1 // pred_region
      _
    $region13: #{encoder_layer.7} parent=1 // pred_fallthru
      _
    // Predicated region
    $region14: #{encoder_layer.7} parent=1 // pred_check
      _
    $region15: #{encoder_layer.7} parent=1 // pred_check_branch
      %18 = sbr.rel (0) target = $region17
    $region16: #{encoder_layer.7} parent=1 // pred_region
      _
    $region17: #{encoder_layer.7} parent=1 // pred_fallthru
      _
    // Predicated region
    $region18: #{encoder_layer.7} parent=1 // pred_check
      _
    $region19: #{encoder_layer.7} parent=1 // pred_check_branch
      %20 = sbr.rel (0) target = $region21
    $region20: #{encoder_layer.7} parent=1 // pred_region
      _
    $region21: #{encoder_layer.7} parent=1 // pred_fallthru
      _
    %p22 = scmp.eq.s32.totalorder 0, 0
    // Predicated region
    $region22: #{encoder_layer.7} parent=1 // pred_check
      %p23 = pneg %p22
    $region23: #{encoder_layer.7} parent=1 // pred_check_branch
      %25 = sbr.rel (%p23) target = $region25
    $region24: #{encoder_layer.7} parent=1 // pred_region
      %vm26 = vcmask 261120
      %27 = vst.msk [vmem:[#allocation2] sm:$0xff] %vm26, 0.0
      %28 = vst.msk [vmem:[#allocation2 + $0x8] sm:$0xff] %vm26, 0.0
    $region25: #{encoder_layer.7} parent=1 // pred_fallthru
      _
    %v29 = vld [vmem:[%s0] sm:$0xff]
    %v30 = vld [vmem:[%s0 + $0x8] sm:$0xff]
    %v31 = vpack.c.bf16 %v30, %v29
    %v32 = vld [vmem:[%s1] sm:$0xf]
    %v33 = vld [vmem:[%s1 + $0x4] sm:$0xf]
    %v34 = vld [vmem:[%s1 + $0x8] sm:$0xf]
    %v35 = vld [vmem:[%s1 + $0xc] sm:$0xf]
    %v36 = vld [vmem:[%s2] sm:$0x1]
    %v38 = vlaneseq
    %v39 = vshrl.u32 %v38, 7
    %v40 = vsub.s32 0, %v39
    %v41 = vrot.slane %v36, %v40
    %v47 = vunpack.c.l.b16 %v32
    %v48 = vunpack.c.l.b16 %v33
    %v49 = vunpack.c.l.b16 %v34
    %v50 = vunpack.c.l.b16 %v35
    %v51 = vpack.c.b16 %v48, %v47
    %v52 = vpack.c.b16 %v50, %v49
    %vm55 = vcmask 261120
    %v57 = vsel %vm55, %v31, 0
    %59 = vmatprep.subr.bf16.mxu0 0
    %60 = vmatpush1.bf16.msra.mxu0 0
    %61 = vmatprep.subr.bf16.mxu0 0
    %62 = vmatpush1.bf16.msra.mxu0 0
    %63 = vmatprep.subr.bf16.mxu0 0
    %64 = vmatpush1.bf16.msra.mxu0 0
    %65 = vmatprep.subr.bf16.mxu0 0
    %66 = vmatpush1.bf16.msra.mxu0 0
    %67 = vmatprep.subr.bf16.mxu0 0
    %68 = vmatpush1.bf16.msra.mxu0 0
    %69 = vmatprep.subr.bf16.mxu0 0
    %70 = vmatpush1.bf16.msra.mxu0 0
    %71 = vmatprep.subr.bf16.mxu0 0
    %72 = vmatpush1.bf16.msra.mxu0 %v52
    %73 = vmatprep.subr.bf16.mxu0 0
    %74 = vmatpush1.bf16.msra.mxu0 %v51
    %75 = vmatprep.subr.bf16.mxu0 0
    %76 = vmatpush2.bf16.msra.mxu0 0
    %77 = vmatprep.subr.bf16.mxu0 0
    %78 = vmatpush2.bf16.msra.mxu0 0
    %79 = vmatprep.subr.bf16.mxu0 0
    %80 = vmatpush2.bf16.msra.mxu0 0
    %81 = vmatprep.subr.bf16.mxu0 0
    %82 = vmatpush2.bf16.msra.mxu0 0
    %83 = vmatprep.subr.bf16.mxu0 0
    %84 = vmatpush2.bf16.msra.mxu0 0
    %85 = vmatprep.subr.bf16.mxu0 0
    %86 = vmatpush2.bf16.msra.mxu0 0
    %87 = vmatprep.subr.bf16.mxu0 0
    %88 = vmatpush2.bf16.msra.mxu0 0
    %89 = vmatprep.subr.bf16.mxu0 0
    %90 = vmatpush2.bf16.msra.mxu0 0
    %91 = vmatprep.mubr.bf16.mxu0 0
    %92 = vmatmul.mubr.bf16.gmra.mxu0 %v57
    %v93 = vpop.f32.mrf.mxu0
    %v94 = vadd.f32 %v41, %v93
    %v95 = vpop.f32.mrf.mxu0
    %v96 = vpop.f32.mrf.mxu0
    %v97 = vadd.f32 %v41, %v96
    %v98 = vpop.f32.mrf.mxu0
    %99 = vdwg.mxu0
    %v100 = vmax.f32 %v94, 0.0
    %v101 = vmax.f32 %v97, 0.0
    %v102 = vld [vmem:[#allocation2] sm:$0xff]
    %v103 = vld [vmem:[#allocation2 + $0x8] sm:$0xff]
    %v104 = vpack.c.bf16 %v101, %v100
    %v105 = vld [vmem:[%s3] sm:$0xf]
    %v106 = vld [vmem:[%s3 + $0x4] sm:$0xf]
    %v107 = vld [vmem:[%s3 + $0x8] sm:$0xf]
    %v108 = vld [vmem:[%s3 + $0xc] sm:$0xf]
    %v109 = vld [vmem:[%s3 + $0x10] sm:$0xf]
    %v110 = vld [vmem:[%s3 + $0x14] sm:$0xf]
    %v111 = vld [vmem:[%s3 + $0x18] sm:$0xf]
    %v112 = vld [vmem:[%s3 + $0x1c] sm:$0xf]
    %v121 = vunpack.c.l.b16 %v105
    %v122 = vunpack.c.l.b16 %v106
    %v123 = vunpack.c.l.b16 %v107
    %v124 = vunpack.c.l.b16 %v108
    %v125 = vunpack.c.l.b16 %v109
    %v126 = vunpack.c.l.b16 %v110
    %v127 = vunpack.c.l.b16 %v111
    %v128 = vunpack.c.l.b16 %v112
    %v129 = vpack.c.b16 %v122, %v121
    %v130 = vpack.c.b16 %v124, %v123
    %v131 = vpack.c.b16 %v126, %v125
    %v132 = vpack.c.b16 %v128, %v127
    %vm137 = vcmask 523264
    %v139 = vsel %vm137, %v104, 0
    %141 = vmatprep.subr.bf16.mxu0 0
    %142 = vmatpush1.bf16.msra.mxu0 0
    %143 = vmatprep.subr.bf16.mxu0 0
    %144 = vmatpush1.bf16.msra.mxu0 0
    %145 = vmatprep.subr.bf16.mxu0 0
    %146 = vmatpush1.bf16.msra.mxu0 0
    %147 = vmatprep.subr.bf16.mxu0 0
    %148 = vmatpush1.bf16.msra.mxu0 0
    %149 = vmatprep.subr.bf16.mxu0 0
    %150 = vmatpush1.bf16.msra.mxu0 %v132
    %151 = vmatprep.subr.bf16.mxu0 0
    %152 = vmatpush1.bf16.msra.mxu0 %v131
    %153 = vmatprep.subr.bf16.mxu0 0
    %154 = vmatpush1.bf16.msra.mxu0 %v130
    %155 = vmatprep.subr.bf16.mxu0 0
    %156 = vmatpush1.bf16.msra.mxu0 %v129
    %157 = vmatprep.subr.bf16.mxu0 0
    %158 = vmatpush2.bf16.msra.mxu0 0
    %159 = vmatprep.subr.bf16.mxu0 0
    %160 = vmatpush2.bf16.msra.mxu0 0
    %161 = vmatprep.subr.bf16.mxu0 0
    %162 = vmatpush2.bf16.msra.mxu0 0
    %163 = vmatprep.subr.bf16.mxu0 0
    %164 = vmatpush2.bf16.msra.mxu0 0
    %165 = vmatprep.subr.bf16.mxu0 0
    %166 = vmatpush2.bf16.msra.mxu0 0
    %167 = vmatprep.subr.bf16.mxu0 0
    %168 = vmatpush2.bf16.msra.mxu0 0
    %169 = vmatprep.subr.bf16.mxu0 0
    %170 = vmatpush2.bf16.msra.mxu0 0
    %171 = vmatprep.subr.bf16.mxu0 0
    %172 = vmatpush2.bf16.msra.mxu0 0
    %173 = vmatprep.mubr.bf16.mxu0 0
    %174 = vmatmul.mubr.bf16.gmra.mxu0 %v139
    %v175 = vpop.f32.mrf.mxu0
    %v176 = vadd.f32 0.0, %v175
    %v177 = vpop.f32.mrf.mxu0
    %v178 = vpop.f32.mrf.mxu0
    %v179 = vadd.f32 0.0, %v178
    %v180 = vpop.f32.mrf.mxu0
    %181 = vdwg.mxu0
    %v182 = vadd.f32 %v102, %v176
    %v183 = vadd.f32 %v103, %v179
    %184 = vst.msk [vmem:[#allocation2] sm:$0xff] %vm55, %v182
    %185 = vst.msk [vmem:[#allocation2 + $0x8] sm:$0xff] %vm55, %v183
    // Predicated region
    $region26: #{encoder_layer.7} parent=1 // pred_check
      %p186 = pneg %p22
    $region27: #{encoder_layer.7} parent=1 // pred_check_branch
      %188 = sbr.rel (%p186) target = $region29
    $region28: #{encoder_layer.7} parent=1 // pred_region
      %v189 = vld [vmem:[#allocation2] sm:$0xff]
      %v190 = vld [vmem:[#allocation2 + $0x8] sm:$0xff]
      %v191 = vld [vmem:[%s4] sm:$0x1]
      %v193 = vlaneseq
      %v194 = vshrl.u32 %v193, 7
      %v195 = vsub.s32 0, %v194
      %v196 = vrot.slane %v191, %v195
      %v198 = vadd.f32 %v189, %v196
      %v199 = vadd.f32 %v190, %v196
      %v200 = vld [vmem:[%s0] sm:$0xff]
      %v201 = vld [vmem:[%s0 + $0x8] sm:$0xff]
      %v202 = vadd.f32 %v198, %v200
      %v203 = vadd.f32 %v199, %v201
      %v204 = vsel %vm55, %v202, 0.0
      %205 = vadd.xlane.f32.xlu0 %v204
      %v206 = vpop.xlane.xlu0 %205
      %v207 = vsel %vm55, %v203, 0.0
      %208 = vadd.xlane.f32.xlu0 %v207
      %v209 = vpop.xlane.xlu0 %208
      %v210 = vrcp.pop 32.0
      %v211 = vmul.f32 %v206, %v210
      %v212 = vmul.f32 %v209, %v210
      %v213 = vsub.f32 %v202, %v211
      %v214 = vsub.f32 %v203, %v212
      %v215 = vmul.f32 %v213, %v213
      %v216 = vmul.f32 %v214, %v214
      %v217 = vsel %vm55, %v215, 0.0
      %218 = vadd.xlane.f32.xlu0 %v217
      %v219 = vpop.xlane.xlu0 %218
      %v220 = vsel %vm55, %v216, 0.0
      %221 = vadd.xlane.f32.xlu0 %v220
      %v222 = vpop.xlane.xlu0 %221
      %v223 = vmul.f32 %v219, %v210
      %v224 = vmul.f32 %v222, %v210
      %v225 = vadd.f32 %v223, 1e-05
      %v226 = vadd.f32 %v224, 1e-05
      %v227 = vrsqrt.pop %v225
      %v228 = vrsqrt.pop %v226
      %v229 = vmul.f32 %v213, %v227
      %v230 = vmul.f32 %v214, %v228
      %231 = vst.msk [vmem:[#allocation3] sm:$0xff] %vm55, %v229
      %232 = vst.msk [vmem:[#allocation3 + $0x8] sm:$0xff] %vm55, %v230
    $region29: #{encoder_layer.7} parent=1 // pred_fallthru
      _
    // Predicated region
    $region30: #{encoder_layer.7} parent=1 // pred_check
      _
    $region31: #{encoder_layer.7} parent=1 // pred_check_branch
      %234 = sbr.rel (0) target = $region33
    $region32: #{encoder_layer.7} parent=1 // pred_region
      %s236 = ssub.s32 256, 256
      %237 = vsyncadd [#allocation4], %s236
      %s238 = sshll.u32 [#allocation3], 4
      %s239 = int_to_ptr.vmem [resolvable:$true] %s238
      %244 = dma.vmem_to_hbm [thread:$0]  %s239, 256, %s5, [#allocation4], 128, 128, 8
    $region33: #{encoder_layer.7} parent=1 // pred_fallthru
      _
    // Predicated region
    $region34: #{encoder_layer.7} parent=1 // pred_check
      _
    $region35: #{encoder_layer.7} parent=1 // pred_check_branch
      %246 = sbr.rel (0) target = $region37
    $region36: #{encoder_layer.7} parent=1 // pred_region
      %247 = dma.done [#allocation4], 256
    $region37: #{encoder_layer.7} parent=1 // pred_fallthru
      _
    %248 = vsyncpa [#allocation4], 1

</llo_original>
